<compile_context>
chip_gen: v5e
topology: v5e:2x2
jax: 0.10.0
libtpu: 0.0.40
codegen_flags: <defaults>
</compile_context>

<pallas_src>
import jax
import jax.numpy as jnp
from jax.experimental import pallas as pl
from jax.experimental.pallas import tpu as pltpu


def _round_up(x, m):
    return (x + m - 1) // m * m


# ------------------------------ kernel ---------------------------------------

def _make_kernel(layers, Hp, Ip, Bp):
    """Build the per-timestep kernel body.  Grid axis 0 iterates over T steps;
    the hidden state lives in the (resident) h_out output block across steps."""

    def _gru_update(g, h_prev):
        # g: (Bp, 4*Hp) gate pre-activations, blocks [r|z|i_n|h_n], biases included.
        r = jax.nn.sigmoid(g[:, 0 * Hp:1 * Hp])
        z = jax.nn.sigmoid(g[:, 1 * Hp:2 * Hp])
        n = jnp.tanh(g[:, 2 * Hp:3 * Hp] + r * g[:, 3 * Hp:4 * Hp])
        return (1.0 - z) * n + z * h_prev

    def kernel(*refs):
        if layers > 1:
            (idx_ref, h_in_ref, wih0_ref, wh_ref, wx_ref, b_ref,
             wout_ref, bout_ref, logit_ref, h_out_ref) = refs
        else:
            (idx_ref, h_in_ref, wih0_ref, wh_ref, b_ref,
             wout_ref, bout_ref, logit_ref, h_out_ref) = refs
            wx_ref = None

        t = pl.program_id(0)

        # Initialize the resident hidden state from the hidden input once.
        @pl.when(t == 0)
        def _():
            h_out_ref[...] = h_in_ref[...]

        # ---- layer 0: one-hot(idx) @ W_ih0, one-hot built in-register -------
        idx = idx_ref[0]                                          # (Bp, 1) int32
        eq = jax.lax.broadcasted_iota(jnp.int32, (Bp, Ip), 1) == idx
        onehot = jnp.where(eq, 1.0, 0.0).astype(jnp.bfloat16)     # (Bp, Ip)
        xg = jnp.dot(onehot, wih0_ref[...],
                     preferred_element_type=jnp.float32)          # (Bp, 4*Hp)

        h0 = h_out_ref[0]
        g0 = (xg
              + jnp.dot(h0.astype(jnp.bfloat16), wh_ref[0],
                        preferred_element_type=jnp.float32)
              + b_ref[0])
        x = _gru_update(g0, h0)
        h_out_ref[0] = x

        # ---- layers 1..L-1: two dots per layer, no concat --------------------
        # TODO(synk): inter-layer dropout is a train-time-only op; eval forward omits it.
        for l in range(1, layers):
            h_l = h_out_ref[l]
            g = (jnp.dot(x.astype(jnp.bfloat16), wx_ref[l - 1],
                         preferred_element_type=jnp.float32)
                 + jnp.dot(h_l.astype(jnp.bfloat16), wh_ref[l],
                           preferred_element_type=jnp.float32)
                 + b_ref[l])
            x = _gru_update(g, h_l)
            h_out_ref[l] = x

        # ---- hidden2output + ReLU (per-step logits, lane-dense stores) ------
        y = jnp.dot(x.astype(jnp.bfloat16), wout_ref[...],
                    preferred_element_type=jnp.float32) + bout_ref[...]
        logit_ref[0] = jnp.maximum(y, 0.0)

    return kernel


# ------------------------------ model ----------------------------------------

class SessionModelPallas:
    """JAX/Pallas re-implementation of SessionModel.forward (eval mode)."""

    def __init__(self, input_size, hidden_size, output_size, layers, dropout,
                 batch_size, key):
        assert layers >= 1
        self.input_size = input_size
        self.hidden_size = hidden_size
        self.output_size = output_size
        self.layers = layers
        self.dropout = dropout          # TODO(synk): unused in eval-mode forward
        self.batch_size = batch_size

        H = hidden_size
        self.Hp = _round_up(H, 128)
        self.Op = _round_up(output_size, 128)
        self.Ip = _round_up(input_size, 128)    # one-hot lane dim
        self.Bp = _round_up(batch_size, 8)
        Hp, Op, Ip, Bp = self.Hp, self.Op, self.Ip, self.Bp

        # ---------------- raw params (match nn.GRU / nn.Linear style init) ----
        bound = 1.0 / (float(H) ** 0.5)
        keys = jax.random.split(key, 4 * layers + 2)
        k = iter(keys)
        raw = []
        for l in range(layers):
            in_dim = input_size if l == 0 else H
            w_ih = jax.random.uniform(next(k), (3 * H, in_dim), jnp.float32, -bound, bound)
            w_hh = jax.random.uniform(next(k), (3 * H, H), jnp.float32, -bound, bound)
            b_ih = jax.random.uniform(next(k), (3 * H,), jnp.float32, -bound, bound)
            b_hh = jax.random.uniform(next(k), (3 * H,), jnp.float32, -bound, bound)
            raw.append((w_ih, w_hh, b_ih, b_hh))
        w_out = jax.random.uniform(next(k), (output_size, H), jnp.float32, -bound, bound)
        b_out = jax.random.uniform(next(k), (output_size,), jnp.float32, -bound, bound)

        # ---------------- packed / padded weights ------------------------------
        # Gate column blocks (each Hp lanes wide):
        #   [0:Hp)=r_sum  [Hp:2Hp)=z_sum  [2Hp:3Hp)=i_n  [3Hp:4Hp)=h_n
        I = input_size
        wih0_t = raw[0][0].T                               # (I, 3H)
        wih0_p = jnp.zeros((Ip, 4 * Hp), jnp.float32)
        wih0_p = wih0_p.at[:I, 0 * Hp:0 * Hp + H].set(wih0_t[:, 0:H])
        wih0_p = wih0_p.at[:I, 1 * Hp:1 * Hp + H].set(wih0_t[:, H:2 * H])
        wih0_p = wih0_p.at[:I, 2 * Hp:2 * Hp + H].set(wih0_t[:, 2 * H:3 * H])

        wh_p = jnp.zeros((layers, Hp, 4 * Hp), jnp.float32)
        b_p = jnp.zeros((layers, 1, 4 * Hp), jnp.float32)
        wx_p = jnp.zeros((max(layers - 1, 1), Hp, 4 * Hp), jnp.float32)
        for l in range(layers):
            w_ih, w_hh, b_ih, b_hh = raw[l]
            whh_t = w_hh.T                                 # (H, 3H)
            wh_p = wh_p.at[l, :H, 0 * Hp:0 * Hp + H].set(whh_t[:, 0:H])
            wh_p = wh_p.at[l, :H, 1 * Hp:1 * Hp + H].set(whh_t[:, H:2 * H])
            wh_p = wh_p.at[l, :H, 3 * Hp:3 * Hp + H].set(whh_t[:, 2 * H:3 * H])
            b_p = b_p.at[l, 0, 0 * Hp:0 * Hp + H].set(b_ih[0:H] + b_hh[0:H])
            b_p = b_p.at[l, 0, 1 * Hp:1 * Hp + H].set(b_ih[H:2 * H] + b_hh[H:2 * H])
            b_p = b_p.at[l, 0, 2 * Hp:2 * Hp + H].set(b_ih[2 * H:3 * H])
            b_p = b_p.at[l, 0, 3 * Hp:3 * Hp + H].set(b_hh[2 * H:3 * H])
            if l >= 1:
                wih_t = w_ih.T                             # (H, 3H)
                wx_p = wx_p.at[l - 1, :H, 0 * Hp:0 * Hp + H].set(wih_t[:, 0:H])
                wx_p = wx_p.at[l - 1, :H, 1 * Hp:1 * Hp + H].set(wih_t[:, H:2 * H])
                wx_p = wx_p.at[l - 1, :H, 2 * Hp:2 * Hp + H].set(wih_t[:, 2 * H:3 * H])

        wout_p = jnp.zeros((Hp, Op), jnp.float32).at[:H, :output_size].set(w_out.T)
        bout_p = jnp.zeros((1, Op), jnp.float32).at[0, :output_size].set(b_out)

        bf16 = jnp.bfloat16
        if layers > 1:
            self._packed = (wih0_p.astype(bf16), wh_p.astype(bf16),
                            wx_p.astype(bf16), b_p,
                            wout_p.astype(bf16), bout_p)
        else:
            # layers == 1: no dummy W_x buffer is allocated or DMA'd.
            self._packed = (wih0_p.astype(bf16), wh_p.astype(bf16), b_p,
                            wout_p.astype(bf16), bout_p)

        self._fwd_cache = {}

    # ---------------- fused pallas_call builder (one per T) -------------------
    def _get_fwd(self, T):
        if T in self._fwd_cache:
            return self._fwd_cache[T]
        L, B, H, O = self.layers, self.batch_size, self.hidden_size, self.output_size
        Hp, Ip, Bp, Op = self.Hp, self.Ip, self.Bp, self.Op

        kernel = _make_kernel(L, Hp, Ip, Bp)

        in_specs = [
            pl.BlockSpec((1, Bp, 1), lambda t: (t, 0, 0)),        # idx, streamed per step
            pl.BlockSpec((L, Bp, Hp), lambda t: (0, 0, 0)),       # h_in, fetched once
            pl.BlockSpec((Ip, 4 * Hp), lambda t: (0, 0)),         # W_ih layer 0 (bf16)
            pl.BlockSpec((L, Hp, 4 * Hp), lambda t: (0, 0, 0)),   # W_hh all layers (bf16)
        ]
        if L > 1:
            in_specs.append(
                pl.BlockSpec((L - 1, Hp, 4 * Hp), lambda t: (0, 0, 0)))  # W_ih layers>=1
        in_specs += [
            pl.BlockSpec((L, 1, 4 * Hp), lambda t: (0, 0, 0)),    # fused biases (f32)
            pl.BlockSpec((Hp, Op), lambda t: (0, 0)),             # W_out (bf16)
            pl.BlockSpec((1, Op), lambda t: (0, 0)),              # b_out (f32)
        ]
        out_specs = (
            pl.BlockSpec((1, Bp, Op), lambda t: (t, 0, 0)),       # per-step logits
            pl.BlockSpec((L, Bp, Hp), lambda t: (0, 0, 0)),       # hidden, resident across T
        )

        call = pl.pallas_call(
            kernel,
            out_shape=(jax.ShapeDtypeStruct((T, Bp, Op), jnp.float32),
                       jax.ShapeDtypeStruct((L, Bp, Hp), jnp.float32)),
            grid=(T,),
            in_specs=in_specs,
            out_specs=out_specs,
            input_output_aliases={1: 1},     # hidden-in HBM buffer reused for hidden-out
            compiler_params=pltpu.CompilerParams(
                dimension_semantics=("arbitrary",)),              # recurrence over T
        )

        def _fwd(idx_TB, hidden, packed):
            idx_pad = jnp.full((T, Bp, 1), -1, jnp.int32)         # -1 -> all-zero one-hot rows
            idx_pad = idx_pad.at[:, :B, 0].set(idx_TB.astype(jnp.int32))
            hid_pad = jnp.zeros((L, Bp, Hp), jnp.float32)
            hid_pad = hid_pad.at[:, :B, :H].set(hidden.astype(jnp.float32))
            logit_p, hid_out_p = call(idx_pad, hid_pad, *packed)
            return logit_p[:, :B, :O], hid_out_p[:, :B, :H]

        f = jax.jit(_fwd)
        self._fwd_cache[T] = f
        return f

    # ---------------- public API ----------------------------------------------
    def init_hidden(self):
        return jnp.zeros((self.layers, self.batch_size, self.hidden_size),
                         jnp.float32)

    def forward(self, indices, hidden):
        """Single step, matches SessionModel.forward: (B,) indices -> (B,O), (L,B,H)."""
        f = self._get_fwd(1)
        logits, hid = f(jnp.reshape(indices, (1, -1)), hidden, self._packed)
        return logits[0], hid

    def forward_sequence(self, indices_TB, hidden):
        """T fused steps in one kernel launch: (T,B) -> (T,B,O), (L,B,H)."""
        T = int(indices_TB.shape[0])
        f = self._get_fwd(T)
        return f(indices_TB, hidden, self._packed)

    # ---------------- pure-JAX reference (same padded weights / dtypes) -------
    def reference_forward(self, idx_TB, hidden):
        L, B, H, O = self.layers, self.batch_size, self.hidden_size, self.output_size
        Hp, Ip, Bp = self.Hp, self.Ip, self.Bp
        if L > 1:
            wih0, wh, wx, b, wout, bout = self._packed
        else:
            wih0, wh, b, wout, bout = self._packed
            wx = None
        f32 = jnp.float32
        T = idx_TB.shape[0]
        h = jnp.zeros((L, Bp, Hp), f32).at[:, :B, :H].set(hidden.astype(f32))
        idx = jnp.full((T, Bp), -1, jnp.int32).at[:, :B].set(idx_TB.astype(jnp.int32))
        logits = []
        for t in range(T):
            eq = jax.lax.broadcasted_iota(jnp.int32, (Bp, Ip), 1) == idx[t][:, None]
            onehot = jnp.where(eq, 1.0, 0.0).astype(jnp.bfloat16)
            xg = jnp.dot(onehot, wih0, preferred_element_type=f32)
            new_h, x = [], None
            for l in range(L):
                h_l = h[l]
                if l == 0:
                    g = xg + jnp.dot(h_l.astype(jnp.bfloat16), wh[0],
                                     preferred_element_type=f32) + b[0]
                else:
                    g = (jnp.dot(x.astype(jnp.bfloat16), wx[l - 1],
                                 preferred_element_type=f32)
                         + jnp.dot(h_l.astype(jnp.bfloat16), wh[l],
                                   preferred_element_type=f32)
                         + b[l])
                r = jax.nn.sigmoid(g[:, 0 * Hp:1 * Hp])
                z = jax.nn.sigmoid(g[:, 1 * Hp:2 * Hp])
                n = jnp.tanh(g[:, 2 * Hp:3 * Hp] + r * g[:, 3 * Hp:4 * Hp])
                x = (1.0 - z) * n + z * h_l
                new_h.append(x)
            h = jnp.stack(new_h, axis=0)
            y = jnp.dot(x.astype(jnp.bfloat16), wout,
                        preferred_element_type=f32) + bout
            logits.append(jnp.maximum(y, 0.0))
        logits = jnp.stack(logits, axis=0)
        return logits[:, :B, :O], h[:, :B, :H]


# ------------------------------ demo ------------------------------------------

if __name__ == "__main__":
    input_size = 32
    hidden_size = 32
    output_size = 16
    layers = 2
    dropout = 0.1
    batch_size = 4
    T = 6

    key = jax.random.PRNGKey(0)
    pkey, ikey = jax.random.split(key)

    model = SessionModelPallas(input_size, hidden_size, output_size, layers,
                               dropout, batch_size, pkey)

    seq = jax.random.randint(ikey, (T, batch_size), 0, input_size, dtype=jnp.int32)
    hidden0 = model.init_hidden()

    # ---- single-step API (matches SessionModel.forward) ----------------------
    logit1, hidden1 = model.forward(seq[0], hidden0)
    jax.block_until_ready((logit1, hidden1))
    assert logit1.shape == (batch_size, output_size)
    assert hidden1.shape == (layers, batch_size, hidden_size)
    assert bool(jnp.all(jnp.isfinite(logit1)))
    assert bool(jnp.all(logit1 >= 0.0))          # ReLU output

    # ---- fused multi-step path (one kernel launch for T tokens) --------------
    logits_seq, hidden_seq = model.forward_sequence(seq, hidden0)
    jax.block_until_ready((logits_seq, hidden_seq))
    assert logits_seq.shape == (T, batch_size, output_size)
    assert hidden_seq.shape == (layers, batch_size, hidden_size)

    # Fused T-step kernel must match T repeated single-step kernel calls.
    h = hidden0
    step_logits = []
    for t in range(T):
        lg, h = model.forward(seq[t], h)
        step_logits.append(lg)
    step_logits = jnp.stack(step_logits, axis=0)
    assert bool(jnp.allclose(logits_seq, step_logits, atol=5e-3, rtol=5e-3))
    assert bool(jnp.allclose(hidden_seq, h, atol=5e-3, rtol=5e-3))

    # And must match the pure-JAX reference of the same math.
    ref_logits, ref_hidden = model.reference_forward(seq, hidden0)
    assert bool(jnp.allclose(logits_seq, ref_logits, atol=5e-3, rtol=5e-3))
    assert bool(jnp.allclose(hidden_seq, ref_hidden, atol=5e-3, rtol=5e-3))

    print("KERNEL_OK")
</pallas_src>

<mosaic_0001>
module attributes {stable_mosaic.version = 11 : i64} {
  func.func @kernel(%arg0: i32, %arg1: memref<1x8x1xi32, #tpu.memory_space<vmem>>, %arg2: memref<2x8x128xf32, #tpu.memory_space<vmem>>, %arg3: memref<128x512xbf16, #tpu.memory_space<vmem>>, %arg4: memref<2x128x512xbf16, #tpu.memory_space<vmem>>, %arg5: memref<1x128x512xbf16, #tpu.memory_space<vmem>>, %arg6: memref<2x1x512xf32, #tpu.memory_space<vmem>>, %arg7: memref<128x128xbf16, #tpu.memory_space<vmem>>, %arg8: memref<1x128xf32, #tpu.memory_space<vmem>>, %arg9: memref<1x8x128xf32, #tpu.memory_space<vmem>>, %arg10: memref<2x8x128xf32, #tpu.memory_space<vmem>>) attributes {dimension_semantics = [#tpu.dimension_semantics<arbitrary>], iteration_bounds = array<i64: 1>, scalar_prefetch = 0 : i64, scratch_operands = 0 : i64, tpu.core_type = #tpu.core_type<tc>, window_params = [{transform_indices = @transform_0, window_bounds = array<i64: 1, 8, 1>}, {pipeline_mode = #tpu.pipeline_mode<synchronous>, transform_indices = @transform_1, window_bounds = array<i64: 2, 8, 128>}, {pipeline_mode = #tpu.pipeline_mode<synchronous>, transform_indices = @transform_2, window_bounds = array<i64: 128, 512>}, {pipeline_mode = #tpu.pipeline_mode<synchronous>, transform_indices = @transform_3, window_bounds = array<i64: 2, 128, 512>}, {pipeline_mode = #tpu.pipeline_mode<synchronous>, transform_indices = @transform_4, window_bounds = array<i64: 1, 128, 512>}, {pipeline_mode = #tpu.pipeline_mode<synchronous>, transform_indices = @transform_5, window_bounds = array<i64: 2, 1, 512>}, {pipeline_mode = #tpu.pipeline_mode<synchronous>, transform_indices = @transform_6, window_bounds = array<i64: 128, 128>}, {pipeline_mode = #tpu.pipeline_mode<synchronous>, transform_indices = @transform_7, window_bounds = array<i64: 1, 128>}, {transform_indices = @transform_8, window_bounds = array<i64: 1, 8, 128>}, {pipeline_mode = #tpu.pipeline_mode<synchronous>, transform_indices = @transform_9, window_bounds = array<i64: 2, 8, 128>}]} {
    %c0_i32 = arith.constant 0 : i32
    %0 = arith.cmpi eq, %arg0, %c0_i32 : i32
    %1 = arith.extui %0 : i1 to i32
    %c0_i32_0 = arith.constant 0 : i32
    %2 = arith.cmpi ne, %1, %c0_i32_0 : i32
    scf.if %2 {
      %c0_51 = arith.constant 0 : index
      %c0_52 = arith.constant 0 : index
      %c0_53 = arith.constant 0 : index
      %101 = vector.load %arg2[%c0_51, %c0_52, %c0_53] : memref<2x8x128xf32, #tpu.memory_space<vmem>>, vector<2x8x128xf32>
      %c0_54 = arith.constant 0 : index
      %c0_55 = arith.constant 0 : index
      %c0_56 = arith.constant 0 : index
      %102 = vector.load %arg10[%c0_54, %c0_55, %c0_56] : memref<2x8x128xf32, #tpu.memory_space<vmem>>, vector<2x8x128xf32>
      tpu.vector_store %arg10[%c0_54, %c0_55, %c0_56], %101 {strides = array<i32>} : memref<2x8x128xf32, #tpu.memory_space<vmem>>, vector<2x8x128xf32>,
    } else {
    }
    %c0 = arith.constant 0 : index
    %c0_1 = arith.constant 0 : index
    %c0_2 = arith.constant 0 : index
    %3 = vector.load %arg1[%c0, %c0_1, %c0_2] : memref<1x8x1xi32, #tpu.memory_space<vmem>>, vector<1x8x1xi32>
    %4 = vector.shape_cast %3 : vector<1x8x1xi32> to vector<8x1xi32>
    %5 = tpu.iota {dimensions = array<i32: 1>} : vector<8x128xi32>
    %6 = vector.broadcast %4 : vector<8x1xi32> to vector<8x128xi32>
    %7 = arith.cmpi eq, %5, %6 : vector<8x128xi32>
    %cst = arith.constant 1.000000e+00 : f32
    %cst_3 = arith.constant 0.000000e+00 : f32
    %8 = vector.broadcast %cst : f32 to vector<8x128xf32>
    %9 = vector.broadcast %cst_3 : f32 to vector<8x128xf32>
    %10 = arith.select %7, %8, %9 : vector<8x128xi1>, vector<8x128xf32>
    %11 = arith.truncf %10 : vector<8x128xf32> to vector<8x128xbf16>
    %c0_4 = arith.constant 0 : index
    %c0_5 = arith.constant 0 : index
    %12 = vector.load %arg3[%c0_4, %c0_5] : memref<128x512xbf16, #tpu.memory_space<vmem>>, vector<128x512xbf16>
    %cst_6 = arith.constant dense<0.000000e+00> : vector<8x512xf32>
    %13 = tpu.matmul %11, %12, %cst_6 {dimension_numbers = #tpu.dot_dimension_numbers<[1], [0], [0], [1], [0, 0, 1, 1], [], []>} : vector<8x128xbf16>, vector<128x512xbf16>, vector<8x512xf32> -> vector<8x512xf32>
    %c0_7 = arith.constant 0 : index
    %c0_8 = arith.constant 0 : index
    %c0_9 = arith.constant 0 : index
    %14 = vector.load %arg10[%c0_7, %c0_8, %c0_9] : memref<2x8x128xf32, #tpu.memory_space<vmem>>, vector<1x8x128xf32>
    %15 = vector.shape_cast %14 : vector<1x8x128xf32> to vector<8x128xf32>
    %16 = arith.truncf %15 : vector<8x128xf32> to vector<8x128xbf16>
    %c0_10 = arith.constant 0 : index
    %c0_11 = arith.constant 0 : index
    %c0_12 = arith.constant 0 : index
    %17 = vector.load %arg4[%c0_10, %c0_11, %c0_12] : memref<2x128x512xbf16, #tpu.memory_space<vmem>>, vector<1x128x512xbf16>
    %18 = vector.shape_cast %17 : vector<1x128x512xbf16> to vector<128x512xbf16>
    %cst_13 = arith.constant dense<0.000000e+00> : vector<8x512xf32>
    %19 = tpu.matmul %16, %18, %cst_13 {dimension_numbers = #tpu.dot_dimension_numbers<[1], [0], [0], [1], [0, 0, 1, 1], [], []>} : vector<8x128xbf16>, vector<128x512xbf16>, vector<8x512xf32> -> vector<8x512xf32>
    %20 = arith.addf %13, %19 : vector<8x512xf32>
    %c0_14 = arith.constant 0 : index
    %c0_15 = arith.constant 0 : index
    %c0_16 = arith.constant 0 : index
    %21 = vector.load %arg6[%c0_14, %c0_15, %c0_16] : memref<2x1x512xf32, #tpu.memory_space<vmem>>, vector<1x1x512xf32>
    %22 = vector.shape_cast %21 : vector<1x1x512xf32> to vector<1x512xf32>
    %23 = vector.broadcast %22 : vector<1x512xf32> to vector<8x512xf32>
    %24 = arith.addf %20, %23 : vector<8x512xf32>
    %25 = vector.extract_strided_slice %24 {offsets = [0, 0], sizes = [8, 128], strides = [1, 1]} : vector<8x512xf32> to vector<8x128xf32>
    %26 = arith.negf %25 : vector<8x128xf32>
    %27 = math.exp %26 : vector<8x128xf32>
    %cst_17 = arith.constant 1.000000e+00 : f32
    %28 = vector.broadcast %cst_17 : f32 to vector<8x128xf32>
    %29 = arith.addf %28, %27 : vector<8x128xf32>
    %30 = arith.divf %28, %29 : vector<8x128xf32>
    %31 = vector.extract_strided_slice %24 {offsets = [0, 128], sizes = [8, 128], strides = [1, 1]} : vector<8x512xf32> to vector<8x128xf32>
    %32 = arith.negf %31 : vector<8x128xf32>
    %33 = math.exp %32 : vector<8x128xf32>
    %cst_18 = arith.constant 1.000000e+00 : f32
    %34 = vector.broadcast %cst_18 : f32 to vector<8x128xf32>
    %35 = arith.addf %34, %33 : vector<8x128xf32>
    %36 = arith.divf %34, %35 : vector<8x128xf32>
    %37 = vector.extract_strided_slice %24 {offsets = [0, 256], sizes = [8, 128], strides = [1, 1]} : vector<8x512xf32> to vector<8x128xf32>
    %38 = vector.extract_strided_slice %24 {offsets = [0, 384], sizes = [8, 128], strides = [1, 1]} : vector<8x512xf32> to vector<8x128xf32>
    %39 = arith.mulf %30, %38 : vector<8x128xf32>
    %40 = arith.addf %37, %39 : vector<8x128xf32>
    %41 = math.tanh %40 : vector<8x128xf32>
    %cst_19 = arith.constant 1.000000e+00 : f32
    %42 = vector.broadcast %cst_19 : f32 to vector<8x128xf32>
    %43 = arith.subf %42, %36 : vector<8x128xf32>
    %44 = arith.mulf %43, %41 : vector<8x128xf32>
    %45 = arith.mulf %36, %15 : vector<8x128xf32>
    %46 = arith.addf %44, %45 : vector<8x128xf32>
    %c0_20 = arith.constant 0 : index
    %c0_21 = arith.constant 0 : index
    %c0_22 = arith.constant 0 : index
    %47 = vector.load %arg10[%c0_20, %c0_21, %c0_22] : memref<2x8x128xf32, #tpu.memory_space<vmem>>, vector<1x8x128xf32>
    %48 = vector.shape_cast %47 : vector<1x8x128xf32> to vector<8x128xf32>
    %49 = vector.shape_cast %46 : vector<8x128xf32> to vector<1x8x128xf32>
    tpu.vector_store %arg10[%c0_20, %c0_21, %c0_22], %49 {strides = array<i32>} : memref<2x8x128xf32, #tpu.memory_space<vmem>>, vector<1x8x128xf32>,
    %c1 = arith.constant 1 : index
    %c0_23 = arith.constant 0 : index
    %c0_24 = arith.constant 0 : index
    %50 = vector.load %arg10[%c1, %c0_23, %c0_24] : memref<2x8x128xf32, #tpu.memory_space<vmem>>, vector<1x8x128xf32>
    %51 = vector.shape_cast %50 : vector<1x8x128xf32> to vector<8x128xf32>
    %52 = arith.truncf %46 : vector<8x128xf32> to vector<8x128xbf16>
    %c0_25 = arith.constant 0 : index
    %c0_26 = arith.constant 0 : index
    %c0_27 = arith.constant 0 : index
    %53 = vector.load %arg5[%c0_25, %c0_26, %c0_27] : memref<1x128x512xbf16, #tpu.memory_space<vmem>>, vector<1x128x512xbf16>
    %54 = vector.shape_cast %53 : vector<1x128x512xbf16> to vector<128x512xbf16>
    %cst_28 = arith.constant dense<0.000000e+00> : vector<8x512xf32>
    %55 = tpu.matmul %52, %54, %cst_28 {dimension_numbers = #tpu.dot_dimension_numbers<[1], [0], [0], [1], [0, 0, 1, 1], [], []>} : vector<8x128xbf16>, vector<128x512xbf16>, vector<8x512xf32> -> vector<8x512xf32>
    %56 = arith.truncf %51 : vector<8x128xf32> to vector<8x128xbf16>
    %c1_29 = arith.constant 1 : index
    %c0_30 = arith.constant 0 : index
    %c0_31 = arith.constant 0 : index
    %57 = vector.load %arg4[%c1_29, %c0_30, %c0_31] : memref<2x128x512xbf16, #tpu.memory_space<vmem>>, vector<1x128x512xbf16>
    %58 = vector.shape_cast %57 : vector<1x128x512xbf16> to vector<128x512xbf16>
    %cst_32 = arith.constant dense<0.000000e+00> : vector<8x512xf32>
    %59 = tpu.matmul %56, %58, %cst_32 {dimension_numbers = #tpu.dot_dimension_numbers<[1], [0], [0], [1], [0, 0, 1, 1], [], []>} : vector<8x128xbf16>, vector<128x512xbf16>, vector<8x512xf32> -> vector<8x512xf32>
    %60 = arith.addf %55, %59 : vector<8x512xf32>
    %c1_33 = arith.constant 1 : index
    %c0_34 = arith.constant 0 : index
    %c0_35 = arith.constant 0 : index
    %61 = vector.load %arg6[%c1_33, %c0_34, %c0_35] : memref<2x1x512xf32, #tpu.memory_space<vmem>>, vector<1x1x512xf32>
    %62 = vector.shape_cast %61 : vector<1x1x512xf32> to vector<1x512xf32>
    %63 = vector.broadcast %62 : vector<1x512xf32> to vector<8x512xf32>
    %64 = arith.addf %60, %63 : vector<8x512xf32>
    %65 = vector.extract_strided_slice %64 {offsets = [0, 0], sizes = [8, 128], strides = [1, 1]} : vector<8x512xf32> to vector<8x128xf32>
    %66 = arith.negf %65 : vector<8x128xf32>
    %67 = math.exp %66 : vector<8x128xf32>
    %cst_36 = arith.constant 1.000000e+00 : f32
    %68 = vector.broadcast %cst_36 : f32 to vector<8x128xf32>
    %69 = arith.addf %68, %67 : vector<8x128xf32>
    %70 = arith.divf %68, %69 : vector<8x128xf32>
    %71 = vector.extract_strided_slice %64 {offsets = [0, 128], sizes = [8, 128], strides = [1, 1]} : vector<8x512xf32> to vector<8x128xf32>
    %72 = arith.negf %71 : vector<8x128xf32>
    %73 = math.exp %72 : vector<8x128xf32>
    %cst_37 = arith.constant 1.000000e+00 : f32
    %74 = vector.broadcast %cst_37 : f32 to vector<8x128xf32>
    %75 = arith.addf %74, %73 : vector<8x128xf32>
    %76 = arith.divf %74, %75 : vector<8x128xf32>
    %77 = vector.extract_strided_slice %64 {offsets = [0, 256], sizes = [8, 128], strides = [1, 1]} : vector<8x512xf32> to vector<8x128xf32>
    %78 = vector.extract_strided_slice %64 {offsets = [0, 384], sizes = [8, 128], strides = [1, 1]} : vector<8x512xf32> to vector<8x128xf32>
    %79 = arith.mulf %70, %78 : vector<8x128xf32>
    %80 = arith.addf %77, %79 : vector<8x128xf32>
    %81 = math.tanh %80 : vector<8x128xf32>
    %cst_38 = arith.constant 1.000000e+00 : f32
    %82 = vector.broadcast %cst_38 : f32 to vector<8x128xf32>
    %83 = arith.subf %82, %76 : vector<8x128xf32>
    %84 = arith.mulf %83, %81 : vector<8x128xf32>
    %85 = arith.mulf %76, %51 : vector<8x128xf32>
    %86 = arith.addf %84, %85 : vector<8x128xf32>
    %c1_39 = arith.constant 1 : index
    %c0_40 = arith.constant 0 : index
    %c0_41 = arith.constant 0 : index
    %87 = vector.load %arg10[%c1_39, %c0_40, %c0_41] : memref<2x8x128xf32, #tpu.memory_space<vmem>>, vector<1x8x128xf32>
    %88 = vector.shape_cast %87 : vector<1x8x128xf32> to vector<8x128xf32>
    %89 = vector.shape_cast %86 : vector<8x128xf32> to vector<1x8x128xf32>
    tpu.vector_store %arg10[%c1_39, %c0_40, %c0_41], %89 {strides = array<i32>} : memref<2x8x128xf32, #tpu.memory_space<vmem>>, vector<1x8x128xf32>,
    %90 = arith.truncf %86 : vector<8x128xf32> to vector<8x128xbf16>
    %c0_42 = arith.constant 0 : index
    %c0_43 = arith.constant 0 : index
    %91 = vector.load %arg7[%c0_42, %c0_43] : memref<128x128xbf16, #tpu.memory_space<vmem>>, vector<128x128xbf16>
    %cst_44 = arith.constant dense<0.000000e+00> : vector<8x128xf32>
    %92 = tpu.matmul %90, %91, %cst_44 {dimension_numbers = #tpu.dot_dimension_numbers<[1], [0], [0], [1], [0, 0, 1, 1], [], []>} : vector<8x128xbf16>, vector<128x128xbf16>, vector<8x128xf32> -> vector<8x128xf32>
    %c0_45 = arith.constant 0 : index
    %c0_46 = arith.constant 0 : index
    %93 = vector.load %arg8[%c0_45, %c0_46] : memref<1x128xf32, #tpu.memory_space<vmem>>, vector<1x128xf32>
    %94 = vector.broadcast %93 : vector<1x128xf32> to vector<8x128xf32>
    %95 = arith.addf %92, %94 : vector<8x128xf32>
    %cst_47 = arith.constant 0.000000e+00 : f32
    %96 = vector.broadcast %cst_47 : f32 to vector<8x128xf32>
    %97 = arith.maximumf %95, %96 : vector<8x128xf32>
    %c0_48 = arith.constant 0 : index
    %c0_49 = arith.constant 0 : index
    %c0_50 = arith.constant 0 : index
    %98 = vector.load %arg9[%c0_48, %c0_49, %c0_50] : memref<1x8x128xf32, #tpu.memory_space<vmem>>, vector<1x8x128xf32>
    %99 = vector.shape_cast %98 : vector<1x8x128xf32> to vector<8x128xf32>
    %100 = vector.shape_cast %97 : vector<8x128xf32> to vector<1x8x128xf32>
    tpu.vector_store %arg9[%c0_48, %c0_49, %c0_50], %100 {strides = array<i32>} : memref<1x8x128xf32, #tpu.memory_space<vmem>>, vector<1x8x128xf32>,
    return
  }
  func.func @transform_0(%arg0: i32) -> (i32, i32, i32) {
    %c0_i32 = arith.constant 0 : i32
    %c0_i32_0 = arith.constant 0 : i32
    %c0_i32_1 = arith.constant 0 : i32
    return %arg0, %c0_i32, %c0_i32_0 : i32, i32, i32
  }
  func.func @transform_1(%arg0: i32) -> (i32, i32, i32) {
    %c0_i32 = arith.constant 0 : i32
    %c0_i32_0 = arith.constant 0 : i32
    %c0_i32_1 = arith.constant 0 : i32
    %c0_i32_2 = arith.constant 0 : i32
    return %c0_i32, %c0_i32_0, %c0_i32_1 : i32, i32, i32
  }
  func.func @transform_2(%arg0: i32) -> (i32, i32) {
    %c0_i32 = arith.constant 0 : i32
    %c0_i32_0 = arith.constant 0 : i32
    %c0_i32_1 = arith.constant 0 : i32
    return %c0_i32, %c0_i32_0 : i32, i32
  }
  func.func @transform_3(%arg0: i32) -> (i32, i32, i32) {
    %c0_i32 = arith.constant 0 : i32
    %c0_i32_0 = arith.constant 0 : i32
    %c0_i32_1 = arith.constant 0 : i32
    %c0_i32_2 = arith.constant 0 : i32
    return %c0_i32, %c0_i32_0, %c0_i32_1 : i32, i32, i32
  }
  func.func @transform_4(%arg0: i32) -> (i32, i32, i32) {
    %c0_i32 = arith.constant 0 : i32
    %c0_i32_0 = arith.constant 0 : i32
    %c0_i32_1 = arith.constant 0 : i32
    %c0_i32_2 = arith.constant 0 : i32
    return %c0_i32, %c0_i32_0, %c0_i32_1 : i32, i32, i32
  }
  func.func @transform_5(%arg0: i32) -> (i32, i32, i32) {
    %c0_i32 = arith.constant 0 : i32
    %c0_i32_0 = arith.constant 0 : i32
    %c0_i32_1 = arith.constant 0 : i32
    %c0_i32_2 = arith.constant 0 : i32
    return %c0_i32, %c0_i32_0, %c0_i32_1 : i32, i32, i32
  }
  func.func @transform_6(%arg0: i32) -> (i32, i32) {
    %c0_i32 = arith.constant 0 : i32
    %c0_i32_0 = arith.constant 0 : i32
    %c0_i32_1 = arith.constant 0 : i32
    return %c0_i32, %c0_i32_0 : i32, i32
  }
  func.func @transform_7(%arg0: i32) -> (i32, i32) {
    %c0_i32 = arith.constant 0 : i32
    %c0_i32_0 = arith.constant 0 : i32
    %c0_i32_1 = arith.constant 0 : i32
    return %c0_i32, %c0_i32_0 : i32, i32
  }
  func.func @transform_8(%arg0: i32) -> (i32, i32, i32) {
    %c0_i32 = arith.constant 0 : i32
    %c0_i32_0 = arith.constant 0 : i32
    %c0_i32_1 = arith.constant 0 : i32
    return %arg0, %c0_i32, %c0_i32_0 : i32, i32, i32
  }
  func.func @transform_9(%arg0: i32) -> (i32, i32, i32) {
    %c0_i32 = arith.constant 0 : i32
    %c0_i32_0 = arith.constant 0 : i32
    %c0_i32_1 = arith.constant 0 : i32
    %c0_i32_2 = arith.constant 0 : i32
    return %c0_i32, %c0_i32_0, %c0_i32_1 : i32, i32, i32
  }
}

</mosaic_0001>

<llo_original>
// kernel: _fwd.1
$region0: #{_fwd.1}
  #allocation0 [shape = 'u32[]', space=smem, size = 0x4, offset = 0x4, fixed_abs, tag = 'smem constant byte address 0x4 - core index']
  #allocation1 [shape = 'u32[72,128]{1,0:T(1,128)}', space=vmem, size = 0x9000, scoped, tag = 'internal scratch']
  %s0 = inlined_call_operand.vmem [shape: s32[1,8,1], index: 0, kind: input, shape index: {}]
  %s1 = inlined_call_operand.vmem [shape: f32[2,8,128], index: 1, kind: input, shape index: {}, may-alias: {1,9}]
  %s2 = inlined_call_operand.hbm [shape: bf16[128,512], index: 2, kind: input, shape index: {}]
  %s3 = inlined_call_operand.hbm [shape: bf16[2,128,512], index: 3, kind: input, shape index: {}]
  %s4 = inlined_call_operand.hbm [shape: bf16[1,128,512], index: 4, kind: input, shape index: {}]
  %s5 = inlined_call_operand.vmem [shape: f32[2,1,512], index: 5, kind: input, shape index: {}]
  %s6 = inlined_call_operand.hbm [shape: bf16[128,128], index: 6, kind: input, shape index: {}]
  %s7 = inlined_call_operand.vmem [shape: f32[1,128], index: 7, kind: input, shape index: {}]
  %s8 = inlined_call_operand.vmem [shape: f32[1,8,128], index: 8, kind: output, shape index: {0}]
  %s9 = inlined_call_operand.vmem [shape: f32[2,8,128], index: 9, kind: output, shape index: {1}, may-alias: {1,9}]
  %10 = xla_tuple %s8, %s9
  %s11 = sld [smem:[#allocation0]]
  $region70: #{_fwd.1} parent=0
    _
  %s13 = ssub.s32 1, %s11
  %s14 = scalar_select 0, %s13, %s11
  $region1: #{_fwd.1} parent=0
    #allocation2 [shape = 'u8[131072]{0}', space=vmem, size = 0x20000, scoped, tag = 'input window, operand 2, single buffered']
    #allocation3 [shape = 's32[1]{0}', space=sflag, size = 0x4, scoped, tag = 'scoped memory for _fwd.1']
    #allocation4 [shape = 'u8[262144]{0}', space=vmem, size = 0x40000, scoped, tag = 'input window, operand 3, single buffered']
    #allocation5 [shape = 's32[1]{0}', space=sflag, size = 0x4, scoped, tag = 'scoped memory for _fwd.1']
    #allocation6 [shape = 'u8[131072]{0}', space=vmem, size = 0x20000, scoped, tag = 'input window, operand 4, single buffered']
    #allocation7 [shape = 'u8[32768]{0}', space=vmem, size = 0x8000, scoped, tag = 'input window, operand 6, single buffered']
    #allocation8 [shape = 's32[1]{0}', space=sflag, size = 0x4, scoped, tag = 'scoped memory for _fwd.1']
    %15 = vsyncpa [#allocation3], 0
    %16 = vsyncpa [#allocation5], 0
    %17 = vsyncpa [#allocation8], 0
    // Predicated region
    $region2: #{_fwd.1} parent=1 // pred_check
      _
    $region3: #{_fwd.1} parent=1 // pred_check_branch
      %19 = sbr.rel (0) target = $region5
    $region4: #{_fwd.1} parent=1 // pred_region
      _
    $region5: #{_fwd.1} parent=1 // pred_fallthru
      _
    // Predicated region
    $region6: #{_fwd.1} parent=1 // pred_check
      _
    $region7: #{_fwd.1} parent=1 // pred_check_branch
      %21 = sbr.rel (0) target = $region9
    $region8: #{_fwd.1} parent=1 // pred_region
      _
    $region9: #{_fwd.1} parent=1 // pred_fallthru
      _
    // Predicated region
    $region10: #{_fwd.1} parent=1 // pred_check
      _
    $region11: #{_fwd.1} parent=1 // pred_check_branch
      %23 = sbr.rel (0) target = $region13
    $region12: #{_fwd.1} parent=1 // pred_region
      %25 = vsyncadd [#allocation3], 0
      %s26 = sshll.u32 %s2, 4
      %s27 = int_to_ptr.hbm [resolvable:$true] %s26
      %s28 = sshll.u32 [#allocation2], 4
      %s29 = int_to_ptr.vmem [resolvable:$true] %s28
      %34 = dma.hbm_to_vmem [thread:$0]  %s27, 4096, %s29, [#allocation3], 256, 256, 16
    $region13: #{_fwd.1} parent=1 // pred_fallthru
      _
    // Predicated region
    $region14: #{_fwd.1} parent=1 // pred_check
      _
    $region15: #{_fwd.1} parent=1 // pred_check_branch
      %36 = sbr.rel (0) target = $region17
    $region16: #{_fwd.1} parent=1 // pred_region
      %38 = vsyncadd [#allocation5], 0
      %s39 = sshll.u32 %s3, 4
      %s40 = int_to_ptr.hbm [resolvable:$true] %s39
      %s41 = sshll.u32 [#allocation4], 4
      %s42 = int_to_ptr.vmem [resolvable:$true] %s41
      %47 = dma.hbm_to_vmem [thread:$0]  %s40, 8192, %s42, [#allocation5], 256, 256, 16
    $region17: #{_fwd.1} parent=1 // pred_fallthru
      _
    // Predicated region
    $region18: #{_fwd.1} parent=1 // pred_check
      _
    $region19: #{_fwd.1} parent=1 // pred_check_branch
      %49 = sbr.rel (0) target = $region21
    $region20: #{_fwd.1} parent=1 // pred_region
      %51 = vsyncadd [#allocation5], 0
      %s52 = sshll.u32 %s4, 4
      %s53 = int_to_ptr.hbm [resolvable:$true] %s52
      %s54 = sshll.u32 [#allocation6], 4
      %s55 = int_to_ptr.vmem [resolvable:$true] %s54
      %60 = dma.hbm_to_vmem [thread:$0]  %s53, 4096, %s55, [#allocation5], 256, 256, 16
    $region21: #{_fwd.1} parent=1 // pred_fallthru
      _
    // Predicated region
    $region22: #{_fwd.1} parent=1 // pred_check
      _
    $region23: #{_fwd.1} parent=1 // pred_check_branch
      %62 = sbr.rel (0) target = $region25
    $region24: #{_fwd.1} parent=1 // pred_region
      _
    $region25: #{_fwd.1} parent=1 // pred_fallthru
      _
    // Predicated region
    $region26: #{_fwd.1} parent=1 // pred_check
      _
    $region27: #{_fwd.1} parent=1 // pred_check_branch
      %64 = sbr.rel (0) target = $region29
    $region28: #{_fwd.1} parent=1 // pred_region
      %66 = vsyncadd [#allocation8], 0
      %s67 = sshll.u32 %s6, 4
      %s68 = int_to_ptr.hbm [resolvable:$true] %s67
      %s69 = sshll.u32 [#allocation7], 4
      %s70 = int_to_ptr.vmem [resolvable:$true] %s69
      %75 = dma.hbm_to_vmem [thread:$0]  %s68, 1024, %s70, [#allocation8], 64, 64, 4
    $region29: #{_fwd.1} parent=1 // pred_fallthru
      _
    // Predicated region
    $region30: #{_fwd.1} parent=1 // pred_check
      _
    $region31: #{_fwd.1} parent=1 // pred_check_branch
      %77 = sbr.rel (0) target = $region33
    $region32: #{_fwd.1} parent=1 // pred_region
      _
    $region33: #{_fwd.1} parent=1 // pred_fallthru
      _
    // Predicated region
    $region34: #{_fwd.1} parent=1 // pred_check
      _
    $region35: #{_fwd.1} parent=1 // pred_check_branch
      %79 = sbr.rel (0) target = $region37
    $region36: #{_fwd.1} parent=1 // pred_region
      %81 = dma.done [#allocation3], 4096
    $region37: #{_fwd.1} parent=1 // pred_fallthru
      _
    // Predicated region
    $region38: #{_fwd.1} parent=1 // pred_check
      _
    $region39: #{_fwd.1} parent=1 // pred_check_branch
      %83 = sbr.rel (0) target = $region41
    $region40: #{_fwd.1} parent=1 // pred_region
      %85 = dma.done [#allocation5], 8192
    $region41: #{_fwd.1} parent=1 // pred_fallthru
      _
    // Predicated region
    $region42: #{_fwd.1} parent=1 // pred_check
      _
    $region43: #{_fwd.1} parent=1 // pred_check_branch
      %87 = sbr.rel (0) target = $region45
    $region44: #{_fwd.1} parent=1 // pred_region
      %89 = dma.done [#allocation5], 4096
    $region45: #{_fwd.1} parent=1 // pred_fallthru
      _
    // Predicated region
    $region46: #{_fwd.1} parent=1 // pred_check
      _
    $region47: #{_fwd.1} parent=1 // pred_check_branch
      %91 = sbr.rel (0) target = $region49
    $region48: #{_fwd.1} parent=1 // pred_region
      %93 = dma.done [#allocation8], 1024
    $region49: #{_fwd.1} parent=1 // pred_fallthru
      _
    %p94 = scmp.eq.s32.totalorder 0, 0
    // Predicated region
    $region50: #{_fwd.1} parent=1 // pred_check
      %p95 = pneg %p94
    $region51: #{_fwd.1} parent=1 // pred_check_branch
      %97 = sbr.rel (%p95) target = $region53
    $region52: #{_fwd.1} parent=1 // pred_region
      %v98 = vld [vmem:[%s1] sm:$0xff]
      %v99 = vld [vmem:[%s1 + $0x8] sm:$0xff]
      %100 = vst [vmem:[%s9] sm:$0xff] %v98
      %101 = vst [vmem:[%s9 + $0x8] sm:$0xff] %v99
    $region53: #{_fwd.1} parent=1 // pred_fallthru
      _
    %v102 = vld [vmem:[%s0] sm:$0xff]
    %v103 = vlaneseq
    %v104 = vand.u32 %v103, 127
    %105 = vset.pattern.permute.xlu0 0
    %106 = vperm.xlu0 %105, %v102
    %v107 = vpop.permute.xlu0 %106
    %vm108 = vcmp.eq.s32.totalorder %v104, %v107
    %v109 = vsel %vm108, 1.0, 0.0
    %v110 = vpack.c.bf16 %v109, %v109
    %v111 = vld [vmem:[#allocation2] sm:$0xff]
    %v112 = vld [vmem:[#allocation2 + $0x8] sm:$0xff]
    %v113 = vld [vmem:[#allocation2 + $0x10] sm:$0xff]
    %v114 = vld [vmem:[#allocation2 + $0x18] sm:$0xff]
    %v115 = vld [vmem:[#allocation2 + $0x20] sm:$0xff]
    %v116 = vld [vmem:[#allocation2 + $0x28] sm:$0xff]
    %v117 = vld [vmem:[#allocation2 + $0x30] sm:$0xff]
    %v118 = vld [vmem:[#allocation2 + $0x38] sm:$0xff]
    %v119 = vld [vmem:[#allocation2 + $0x40] sm:$0xff]
    %v120 = vld [vmem:[#allocation2 + $0x48] sm:$0xff]
    %v121 = vld [vmem:[#allocation2 + $0x50] sm:$0xff]
    %v122 = vld [vmem:[#allocation2 + $0x58] sm:$0xff]
    %v123 = vld [vmem:[#allocation2 + $0x60] sm:$0xff]
    %v124 = vld [vmem:[#allocation2 + $0x68] sm:$0xff]
    %v125 = vld [vmem:[#allocation2 + $0x70] sm:$0xff]
    %v126 = vld [vmem:[#allocation2 + $0x78] sm:$0xff]
    %v127 = vld [vmem:[#allocation2 + $0x80] sm:$0xff]
    %v128 = vld [vmem:[#allocation2 + $0x88] sm:$0xff]
    %v129 = vld [vmem:[#allocation2 + $0x90] sm:$0xff]
    %v130 = vld [vmem:[#allocation2 + $0x98] sm:$0xff]
    %v131 = vld [vmem:[#allocation2 + $0xa0] sm:$0xff]
    %v132 = vld [vmem:[#allocation2 + $0xa8] sm:$0xff]
    %v133 = vld [vmem:[#allocation2 + $0xb0] sm:$0xff]
    %v134 = vld [vmem:[#allocation2 + $0xb8] sm:$0xff]
    %v135 = vld [vmem:[#allocation2 + $0xc0] sm:$0xff]
    %v136 = vld [vmem:[#allocation2 + $0xc8] sm:$0xff]
    %v137 = vld [vmem:[#allocation2 + $0xd0] sm:$0xff]
    %v138 = vld [vmem:[#allocation2 + $0xd8] sm:$0xff]
    %v139 = vld [vmem:[#allocation2 + $0xe0] sm:$0xff]
    %v140 = vld [vmem:[#allocation2 + $0xe8] sm:$0xff]
    %v141 = vld [vmem:[#allocation2 + $0xf0] sm:$0xff]
    %v142 = vld [vmem:[#allocation2 + $0xf8] sm:$0xff]
    %v143 = vld [vmem:[%s9] sm:$0xff]
    %v144 = vpack.c.bf16 %v143, %v143
    %v145 = vld [vmem:[#allocation4] sm:$0xff]
    %v146 = vld [vmem:[#allocation4 + $0x8] sm:$0xff]
    %v147 = vld [vmem:[#allocation4 + $0x10] sm:$0xff]
    %v148 = vld [vmem:[#allocation4 + $0x18] sm:$0xff]
    %v149 = vld [vmem:[#allocation4 + $0x20] sm:$0xff]
    %v150 = vld [vmem:[#allocation4 + $0x28] sm:$0xff]
    %v151 = vld [vmem:[#allocation4 + $0x30] sm:$0xff]
    %v152 = vld [vmem:[#allocation4 + $0x38] sm:$0xff]
    %v153 = vld [vmem:[#allocation4 + $0x40] sm:$0xff]
    %v154 = vld [vmem:[#allocation4 + $0x48] sm:$0xff]
    %v155 = vld [vmem:[#allocation4 + $0x50] sm:$0xff]
    %v156 = vld [vmem:[#allocation4 + $0x58] sm:$0xff]
    %v157 = vld [vmem:[#allocation4 + $0x60] sm:$0xff]
    %v158 = vld [vmem:[#allocation4 + $0x68] sm:$0xff]
    %v159 = vld [vmem:[#allocation4 + $0x70] sm:$0xff]
    %v160 = vld [vmem:[#allocation4 + $0x78] sm:$0xff]
    %v161 = vld [vmem:[#allocation4 + $0x80] sm:$0xff]
    %v162 = vld [vmem:[#allocation4 + $0x88] sm:$0xff]
    %v163 = vld [vmem:[#allocation4 + $0x90] sm:$0xff]
    %v164 = vld [vmem:[#allocation4 + $0x98] sm:$0xff]
    %v165 = vld [vmem:[#allocation4 + $0xa0] sm:$0xff]
    %v166 = vld [vmem:[#allocation4 + $0xa8] sm:$0xff]
    %v167 = vld [vmem:[#allocation4 + $0xb0] sm:$0xff]
    %v168 = vld [vmem:[#allocation4 + $0xb8] sm:$0xff]
    %v169 = vld [vmem:[#allocation4 + $0xc0] sm:$0xff]
    %v170 = vld [vmem:[#allocation4 + $0xc8] sm:$0xff]
    %v171 = vld [vmem:[#allocation4 + $0xd0] sm:$0xff]
    %v172 = vld [vmem:[#allocation4 + $0xd8] sm:$0xff]
    %v173 = vld [vmem:[#allocation4 + $0xe0] sm:$0xff]
    %v174 = vld [vmem:[#allocation4 + $0xe8] sm:$0xff]
    %v175 = vld [vmem:[#allocation4 + $0xf0] sm:$0xff]
    %v176 = vld [vmem:[#allocation4 + $0xf8] sm:$0xff]
    %v209 = vunpack.c.l.b16 %v145
    %v210 = vunpack.c.h.b16 %v145
    %v211 = vunpack.c.l.b16 %v146
    %v212 = vunpack.c.h.b16 %v146
    %v213 = vunpack.c.l.b16 %v147
    %v214 = vunpack.c.h.b16 %v147
    %v215 = vunpack.c.l.b16 %v148
    %v216 = vunpack.c.h.b16 %v148
    %v217 = vunpack.c.l.b16 %v149
    %v218 = vunpack.c.h.b16 %v149
    %v219 = vunpack.c.l.b16 %v150
    %v220 = vunpack.c.h.b16 %v150
    %v221 = vunpack.c.l.b16 %v151
    %v222 = vunpack.c.h.b16 %v151
    %v223 = vunpack.c.l.b16 %v152
    %v224 = vunpack.c.h.b16 %v152
    %v225 = vunpack.c.l.b16 %v153
    %v226 = vunpack.c.h.b16 %v153
    %v227 = vunpack.c.l.b16 %v154
    %v228 = vunpack.c.h.b16 %v154
    %v229 = vunpack.c.l.b16 %v155
    %v230 = vunpack.c.h.b16 %v155
    %v231 = vunpack.c.l.b16 %v156
    %v232 = vunpack.c.h.b16 %v156
    %v233 = vunpack.c.l.b16 %v157
    %v234 = vunpack.c.h.b16 %v157
    %v235 = vunpack.c.l.b16 %v158
    %v236 = vunpack.c.h.b16 %v158
    %v237 = vunpack.c.l.b16 %v159
    %v238 = vunpack.c.h.b16 %v159
    %v239 = vunpack.c.l.b16 %v160
    %v240 = vunpack.c.h.b16 %v160
    %v241 = vunpack.c.l.b16 %v161
    %v242 = vunpack.c.h.b16 %v161
    %v243 = vunpack.c.l.b16 %v162
    %v244 = vunpack.c.h.b16 %v162
    %v245 = vunpack.c.l.b16 %v163
    %v246 = vunpack.c.h.b16 %v163
    %v247 = vunpack.c.l.b16 %v164
    %v248 = vunpack.c.h.b16 %v164
    %v249 = vunpack.c.l.b16 %v165
    %v250 = vunpack.c.h.b16 %v165
    %v251 = vunpack.c.l.b16 %v166
    %v252 = vunpack.c.h.b16 %v166
    %v253 = vunpack.c.l.b16 %v167
    %v254 = vunpack.c.h.b16 %v167
    %v255 = vunpack.c.l.b16 %v168
    %v256 = vunpack.c.h.b16 %v168
    %v257 = vunpack.c.l.b16 %v169
    %v258 = vunpack.c.h.b16 %v169
    %v259 = vunpack.c.l.b16 %v170
    %v260 = vunpack.c.h.b16 %v170
    %v261 = vunpack.c.l.b16 %v171
    %v262 = vunpack.c.h.b16 %v171
    %v263 = vunpack.c.l.b16 %v172
    %v264 = vunpack.c.h.b16 %v172
    %v265 = vunpack.c.l.b16 %v173
    %v266 = vunpack.c.h.b16 %v173
    %v267 = vunpack.c.l.b16 %v174
    %v268 = vunpack.c.h.b16 %v174
    %v269 = vunpack.c.l.b16 %v175
    %v270 = vunpack.c.h.b16 %v175
    %v271 = vunpack.c.l.b16 %v176
    %v272 = vunpack.c.h.b16 %v176
    %v273 = vpack.c.b16 %v213, %v209
    %v274 = vpack.c.b16 %v214, %v210
    %v275 = vpack.c.b16 %v215, %v211
    %v276 = vpack.c.b16 %v216, %v212
    %v277 = vpack.c.b16 %v221, %v217
    %v278 = vpack.c.b16 %v222, %v218
    %v279 = vpack.c.b16 %v223, %v219
    %v280 = vpack.c.b16 %v224, %v220
    %v281 = vpack.c.b16 %v229, %v225
    %v282 = vpack.c.b16 %v230, %v226
    %v283 = vpack.c.b16 %v231, %v227
    %v284 = vpack.c.b16 %v232, %v228
    %v285 = vpack.c.b16 %v237, %v233
    %v286 = vpack.c.b16 %v238, %v234
    %v287 = vpack.c.b16 %v239, %v235
    %v288 = vpack.c.b16 %v240, %v236
    %v289 = vpack.c.b16 %v245, %v241
    %v290 = vpack.c.b16 %v246, %v242
    %v291 = vpack.c.b16 %v247, %v243
    %v292 = vpack.c.b16 %v248, %v244
    %v293 = vpack.c.b16 %v253, %v249
    %v294 = vpack.c.b16 %v254, %v250
    %v295 = vpack.c.b16 %v255, %v251
    %v296 = vpack.c.b16 %v256, %v252
    %v297 = vpack.c.b16 %v261, %v257
    %v298 = vpack.c.b16 %v262, %v258
    %v299 = vpack.c.b16 %v263, %v259
    %v300 = vpack.c.b16 %v264, %v260
    %v301 = vpack.c.b16 %v269, %v265
    %v302 = vpack.c.b16 %v270, %v266
    %v303 = vpack.c.b16 %v271, %v267
    %v304 = vpack.c.b16 %v272, %v268
    %337 = vmatpush.bf16.msra.mxu0 %v301
    %338 = vmatpush.bf16.msra.mxu0 %v297
    %339 = vmatpush.bf16.msra.mxu0 %v293
    %340 = vmatpush.bf16.msra.mxu0 %v289
    %341 = vmatpush.bf16.msra.mxu0 %v285
    %342 = vmatpush.bf16.msra.mxu0 %v281
    %343 = vmatpush.bf16.msra.mxu0 %v277
    %344 = vmatpush.bf16.msra.mxu0 %v273
    %345 = vmatmul.bf16.gmra.mxu0 %v144
    %v346 = vpop.f32.mrf.mxu0
    %v347 = vadd.f32 0.0, %v346
    %v348 = vpop.f32.mrf.mxu0
    %349 = vdwg.mxu0
    %350 = vmatpush.bf16.msra.mxu0 %v302
    %351 = vmatpush.bf16.msra.mxu0 %v298
    %352 = vmatpush.bf16.msra.mxu0 %v294
    %353 = vmatpush.bf16.msra.mxu0 %v290
    %354 = vmatpush.bf16.msra.mxu0 %v286
    %355 = vmatpush.bf16.msra.mxu0 %v282
    %356 = vmatpush.bf16.msra.mxu0 %v278
    %357 = vmatpush.bf16.msra.mxu0 %v274
    %358 = vmatmul.bf16.gmra.mxu0 %v144
    %v359 = vpop.f32.mrf.mxu0
    %v360 = vadd.f32 0.0, %v359
    %v361 = vpop.f32.mrf.mxu0
    %362 = vdwg.mxu0
    %363 = vmatpush.bf16.msra.mxu0 %v303
    %364 = vmatpush.bf16.msra.mxu0 %v299
    %365 = vmatpush.bf16.msra.mxu0 %v295
    %366 = vmatpush.bf16.msra.mxu0 %v291
    %367 = vmatpush.bf16.msra.mxu0 %v287
    %368 = vmatpush.bf16.msra.mxu0 %v283
    %369 = vmatpush.bf16.msra.mxu0 %v279
    %370 = vmatpush.bf16.msra.mxu0 %v275
    %371 = vmatmul.bf16.gmra.mxu0 %v144
    %v372 = vpop.f32.mrf.mxu0
    %v373 = vadd.f32 0.0, %v372
    %v374 = vpop.f32.mrf.mxu0
    %375 = vdwg.mxu0
    %376 = vmatpush.bf16.msra.mxu0 %v304
    %377 = vmatpush.bf16.msra.mxu0 %v300
    %378 = vmatpush.bf16.msra.mxu0 %v296
    %379 = vmatpush.bf16.msra.mxu0 %v292
    %380 = vmatpush.bf16.msra.mxu0 %v288
    %381 = vmatpush.bf16.msra.mxu0 %v284
    %382 = vmatpush.bf16.msra.mxu0 %v280
    %383 = vmatpush.bf16.msra.mxu0 %v276
    %384 = vmatmul.bf16.gmra.mxu0 %v144
    %v385 = vpop.f32.mrf.mxu0
    %v386 = vadd.f32 0.0, %v385
    %v387 = vpop.f32.mrf.mxu0
    %388 = vdwg.mxu0
    %v421 = vunpack.c.l.b16 %v111
    %v422 = vunpack.c.h.b16 %v111
    %v423 = vunpack.c.l.b16 %v112
    %v424 = vunpack.c.h.b16 %v112
    %v425 = vunpack.c.l.b16 %v113
    %v426 = vunpack.c.h.b16 %v113
    %v427 = vunpack.c.l.b16 %v114
    %v428 = vunpack.c.h.b16 %v114
    %v429 = vunpack.c.l.b16 %v115
    %v430 = vunpack.c.h.b16 %v115
    %v431 = vunpack.c.l.b16 %v116
    %v432 = vunpack.c.h.b16 %v116
    %v433 = vunpack.c.l.b16 %v117
    %v434 = vunpack.c.h.b16 %v117
    %v435 = vunpack.c.l.b16 %v118
    %v436 = vunpack.c.h.b16 %v118
    %v437 = vunpack.c.l.b16 %v119
    %v438 = vunpack.c.h.b16 %v119
    %v439 = vunpack.c.l.b16 %v120
    %v440 = vunpack.c.h.b16 %v120
    %v441 = vunpack.c.l.b16 %v121
    %v442 = vunpack.c.h.b16 %v121
    %v443 = vunpack.c.l.b16 %v122
    %v444 = vunpack.c.h.b16 %v122
    %v445 = vunpack.c.l.b16 %v123
    %v446 = vunpack.c.h.b16 %v123
    %v447 = vunpack.c.l.b16 %v124
    %v448 = vunpack.c.h.b16 %v124
    %v449 = vunpack.c.l.b16 %v125
    %v450 = vunpack.c.h.b16 %v125
    %v451 = vunpack.c.l.b16 %v126
    %v452 = vunpack.c.h.b16 %v126
    %v453 = vunpack.c.l.b16 %v127
    %v454 = vunpack.c.h.b16 %v127
    %v455 = vunpack.c.l.b16 %v128
    %v456 = vunpack.c.h.b16 %v128
    %v457 = vunpack.c.l.b16 %v129
    %v458 = vunpack.c.h.b16 %v129
    %v459 = vunpack.c.l.b16 %v130
    %v460 = vunpack.c.h.b16 %v130
    %v461 = vunpack.c.l.b16 %v131
    %v462 = vunpack.c.h.b16 %v131
    %v463 = vunpack.c.l.b16 %v132
    %v464 = vunpack.c.h.b16 %v132
    %v465 = vunpack.c.l.b16 %v133
    %v466 = vunpack.c.h.b16 %v133
    %v467 = vunpack.c.l.b16 %v134
    %v468 = vunpack.c.h.b16 %v134
    %v469 = vunpack.c.l.b16 %v135
    %v470 = vunpack.c.h.b16 %v135
    %v471 = vunpack.c.l.b16 %v136
    %v472 = vunpack.c.h.b16 %v136
    %v473 = vunpack.c.l.b16 %v137
    %v474 = vunpack.c.h.b16 %v137
    %v475 = vunpack.c.l.b16 %v138
    %v476 = vunpack.c.h.b16 %v138
    %v477 = vunpack.c.l.b16 %v139
    %v478 = vunpack.c.h.b16 %v139
    %v479 = vunpack.c.l.b16 %v140
    %v480 = vunpack.c.h.b16 %v140
    %v481 = vunpack.c.l.b16 %v141
    %v482 = vunpack.c.h.b16 %v141
    %v483 = vunpack.c.l.b16 %v142
    %v484 = vunpack.c.h.b16 %v142
    %v485 = vpack.c.b16 %v425, %v421
    %v486 = vpack.c.b16 %v426, %v422
    %v487 = vpack.c.b16 %v427, %v423
    %v488 = vpack.c.b16 %v428, %v424
    %v489 = vpack.c.b16 %v433, %v429
    %v490 = vpack.c.b16 %v434, %v430
    %v491 = vpack.c.b16 %v435, %v431
    %v492 = vpack.c.b16 %v436, %v432
    %v493 = vpack.c.b16 %v441, %v437
    %v494 = vpack.c.b16 %v442, %v438
    %v495 = vpack.c.b16 %v443, %v439
    %v496 = vpack.c.b16 %v444, %v440
    %v497 = vpack.c.b16 %v449, %v445
    %v498 = vpack.c.b16 %v450, %v446
    %v499 = vpack.c.b16 %v451, %v447
    %v500 = vpack.c.b16 %v452, %v448
    %v501 = vpack.c.b16 %v457, %v453
    %v502 = vpack.c.b16 %v458, %v454
    %v503 = vpack.c.b16 %v459, %v455
    %v504 = vpack.c.b16 %v460, %v456
    %v505 = vpack.c.b16 %v465, %v461
    %v506 = vpack.c.b16 %v466, %v462
    %v507 = vpack.c.b16 %v467, %v463
    %v508 = vpack.c.b16 %v468, %v464
    %v509 = vpack.c.b16 %v473, %v469
    %v510 = vpack.c.b16 %v474, %v470
    %v511 = vpack.c.b16 %v475, %v471
    %v512 = vpack.c.b16 %v476, %v472
    %v513 = vpack.c.b16 %v481, %v477
    %v514 = vpack.c.b16 %v482, %v478
    %v515 = vpack.c.b16 %v483, %v479
    %v516 = vpack.c.b16 %v484, %v480
    %549 = vmatpush.bf16.msra.mxu0 %v513
    %550 = vmatpush.bf16.msra.mxu0 %v509
    %551 = vmatpush.bf16.msra.mxu0 %v505
    %552 = vmatpush.bf16.msra.mxu0 %v501
    %553 = vmatpush.bf16.msra.mxu0 %v497
    %554 = vmatpush.bf16.msra.mxu0 %v493
    %555 = vmatpush.bf16.msra.mxu0 %v489
    %556 = vmatpush.bf16.msra.mxu0 %v485
    %557 = vmatmul.bf16.gmra.mxu0 %v110
    %v558 = vpop.f32.mrf.mxu0
    %v559 = vadd.f32 %v347, %v558
    %v560 = vpop.f32.mrf.mxu0
    %561 = vdwg.mxu0
    %562 = vmatpush.bf16.msra.mxu0 %v514
    %563 = vmatpush.bf16.msra.mxu0 %v510
    %564 = vmatpush.bf16.msra.mxu0 %v506
    %565 = vmatpush.bf16.msra.mxu0 %v502
    %566 = vmatpush.bf16.msra.mxu0 %v498
    %567 = vmatpush.bf16.msra.mxu0 %v494
    %568 = vmatpush.bf16.msra.mxu0 %v490
    %569 = vmatpush.bf16.msra.mxu0 %v486
    %570 = vmatmul.bf16.gmra.mxu0 %v110
    %v571 = vpop.f32.mrf.mxu0
    %v572 = vadd.f32 %v360, %v571
    %v573 = vpop.f32.mrf.mxu0
    %574 = vdwg.mxu0
    %575 = vmatpush.bf16.msra.mxu0 %v515
    %576 = vmatpush.bf16.msra.mxu0 %v511
    %577 = vmatpush.bf16.msra.mxu0 %v507
    %578 = vmatpush.bf16.msra.mxu0 %v503
    %579 = vmatpush.bf16.msra.mxu0 %v499
    %580 = vmatpush.bf16.msra.mxu0 %v495
    %581 = vmatpush.bf16.msra.mxu0 %v491
    %582 = vmatpush.bf16.msra.mxu0 %v487
    %583 = vmatmul.bf16.gmra.mxu0 %v110
    %v584 = vpop.f32.mrf.mxu0
    %v585 = vadd.f32 %v373, %v584
    %v586 = vpop.f32.mrf.mxu0
    %587 = vdwg.mxu0
    %588 = vmatpush.bf16.msra.mxu0 %v516
    %589 = vmatpush.bf16.msra.mxu0 %v512
    %590 = vmatpush.bf16.msra.mxu0 %v508
    %591 = vmatpush.bf16.msra.mxu0 %v504
    %592 = vmatpush.bf16.msra.mxu0 %v500
    %593 = vmatpush.bf16.msra.mxu0 %v496
    %594 = vmatpush.bf16.msra.mxu0 %v492
    %595 = vmatpush.bf16.msra.mxu0 %v488
    %596 = vmatmul.bf16.gmra.mxu0 %v110
    %v597 = vpop.f32.mrf.mxu0
    %v598 = vadd.f32 %v386, %v597
    %v599 = vpop.f32.mrf.mxu0
    %600 = vdwg.mxu0
    %v601 = vld [vmem:[%s5] sm:$0xf]
    %v603 = vperm.slane %v601, 0
    %v604 = vperm.slane %v601, 1
    %v605 = vperm.slane %v601, 2
    %v606 = vperm.slane %v601, 3
    %v611 = vadd.f32 %v559, %v603
    %v612 = vadd.f32 %v572, %v604
    %v613 = vadd.f32 %v585, %v605
    %v614 = vadd.f32 %v598, %v606
    %v615 = vxor.u32 %v611, 2147483648
    %v616 = vmul.f32 %v615, 1.442695
    %v617 = vpow.pop %v616
    %v618 = vadd.f32 %v617, 1.0
    %v619 = vrcp.pop %v618
    %v620 = vmul.f32 %v618, %v619
    %v621 = vsub.f32 1.0, %v620
    %v622 = vmul.f32 %v619, %v621
    %v623 = vadd.f32 %v619, %v622
    %vm624 = vweird.f32 %v618
    %vm625 = vweird.f32 %v619
    %vm626 = vmor %vm624, %vm625
    %v627 = vsel %vm626, %v619, %v623
    %v628 = vand.u32 2147483647, %v618
    %vm629 = vcmp.eq.f32.partialorder %v628, 8.507059e+37
    %v630 = vand.u32 %v618, 2147483648
    %v631 = vor.u32 1.1754944e-38, %v630
    %v632 = vsel %vm629, %v631, %v627
    %v633 = vmul.f32 1.0, %v632
    %v634 = vxor.u32 %v612, 2147483648
    %v635 = vmul.f32 %v634, 1.442695
    %v636 = vpow.pop %v635
    %v637 = vadd.f32 %v636, 1.0
    %v638 = vrcp.pop %v637
    %v639 = vmul.f32 %v637, %v638
    %v640 = vsub.f32 1.0, %v639
    %v641 = vmul.f32 %v638, %v640
    %v642 = vadd.f32 %v638, %v641
    %vm643 = vweird.f32 %v637
    %vm644 = vweird.f32 %v638
    %vm645 = vmor %vm643, %vm644
    %v646 = vsel %vm645, %v638, %v642
    %v647 = vand.u32 2147483647, %v637
    %vm648 = vcmp.eq.f32.partialorder %v647, 8.507059e+37
    %v649 = vand.u32 %v637, 2147483648
    %v650 = vor.u32 1.1754944e-38, %v649
    %v651 = vsel %vm648, %v650, %v646
    %v652 = vmul.f32 1.0, %v651
    %v653 = vmul.f32 %v633, %v614
    %v654 = vadd.f32 %v613, %v653
    %v655 = vtanh.pop %v654
    %v656 = vsub.f32 1.0, %v652
    %v657 = vmul.f32 %v656, %v655
    %v658 = vmul.f32 %v652, %v143
    %v659 = vadd.f32 %v657, %v658
    %660 = vst [vmem:[%s9] sm:$0xff] %v659
    %s661 = scalar_lea.vmem %s9, 8
    %v662 = vld [vmem:[%s661] sm:$0xff]
    %v663 = vpack.c.bf16 %v659, %v659
    %v664 = vld [vmem:[#allocation6] sm:$0xff]
    %v665 = vld [vmem:[#allocation6 + $0x8] sm:$0xff]
    %v666 = vld [vmem:[#allocation6 + $0x10] sm:$0xff]
    %v667 = vld [vmem:[#allocation6 + $0x18] sm:$0xff]
    %v668 = vld [vmem:[#allocation6 + $0x20] sm:$0xff]
    %v669 = vld [vmem:[#allocation6 + $0x28] sm:$0xff]
    %v670 = vld [vmem:[#allocation6 + $0x30] sm:$0xff]
    %v671 = vld [vmem:[#allocation6 + $0x38] sm:$0xff]
    %v672 = vld [vmem:[#allocation6 + $0x40] sm:$0xff]
    %v673 = vld [vmem:[#allocation6 + $0x48] sm:$0xff]
    %v674 = vld [vmem:[#allocation6 + $0x50] sm:$0xff]
    %v675 = vld [vmem:[#allocation6 + $0x58] sm:$0xff]
    %v676 = vld [vmem:[#allocation6 + $0x60] sm:$0xff]
    %v677 = vld [vmem:[#allocation6 + $0x68] sm:$0xff]
    %v678 = vld [vmem:[#allocation6 + $0x70] sm:$0xff]
    %v679 = vld [vmem:[#allocation6 + $0x78] sm:$0xff]
    %v680 = vld [vmem:[#allocation6 + $0x80] sm:$0xff]
    %v681 = vld [vmem:[#allocation6 + $0x88] sm:$0xff]
    %v682 = vld [vmem:[#allocation6 + $0x90] sm:$0xff]
    %v683 = vld [vmem:[#allocation6 + $0x98] sm:$0xff]
    %v684 = vld [vmem:[#allocation6 + $0xa0] sm:$0xff]
    %v685 = vld [vmem:[#allocation6 + $0xa8] sm:$0xff]
    %v686 = vld [vmem:[#allocation6 + $0xb0] sm:$0xff]
    %v687 = vld [vmem:[#allocation6 + $0xb8] sm:$0xff]
    %v688 = vld [vmem:[#allocation6 + $0xc0] sm:$0xff]
    %v689 = vld [vmem:[#allocation6 + $0xc8] sm:$0xff]
    %v690 = vld [vmem:[#allocation6 + $0xd0] sm:$0xff]
    %v691 = vld [vmem:[#allocation6 + $0xd8] sm:$0xff]
    %v692 = vld [vmem:[#allocation6 + $0xe0] sm:$0xff]
    %v693 = vld [vmem:[#allocation6 + $0xe8] sm:$0xff]
    %v694 = vld [vmem:[#allocation6 + $0xf0] sm:$0xff]
    %v695 = vld [vmem:[#allocation6 + $0xf8] sm:$0xff]
    %v696 = vpack.c.bf16 %v662, %v662
    %s697 = scalar_lea.vmem [#allocation4], 256
    %v698 = vld [vmem:[%s697] sm:$0xff]
    %v699 = vld [vmem:[%s697 + $0x8] sm:$0xff]
    %v700 = vld [vmem:[%s697 + $0x10] sm:$0xff]
    %v701 = vld [vmem:[%s697 + $0x18] sm:$0xff]
    %v702 = vld [vmem:[%s697 + $0x20] sm:$0xff]
    %v703 = vld [vmem:[%s697 + $0x28] sm:$0xff]
    %v704 = vld [vmem:[%s697 + $0x30] sm:$0xff]
    %v705 = vld [vmem:[%s697 + $0x38] sm:$0xff]
    %v706 = vld [vmem:[%s697 + $0x40] sm:$0xff]
    %v707 = vld [vmem:[%s697 + $0x48] sm:$0xff]
    %v708 = vld [vmem:[%s697 + $0x50] sm:$0xff]
    %v709 = vld [vmem:[%s697 + $0x58] sm:$0xff]
    %v710 = vld [vmem:[%s697 + $0x60] sm:$0xff]
    %v711 = vld [vmem:[%s697 + $0x68] sm:$0xff]
    %v712 = vld [vmem:[%s697 + $0x70] sm:$0xff]
    %v713 = vld [vmem:[%s697 + $0x78] sm:$0xff]
    %v714 = vld [vmem:[%s697 + $0x80] sm:$0xff]
    %v715 = vld [vmem:[%s697 + $0x88] sm:$0xff]
    %v716 = vld [vmem:[%s697 + $0x90] sm:$0xff]
    %v717 = vld [vmem:[%s697 + $0x98] sm:$0xff]
    %v718 = vld [vmem:[%s697 + $0xa0] sm:$0xff]
    %v719 = vld [vmem:[%s697 + $0xa8] sm:$0xff]
    %v720 = vld [vmem:[%s697 + $0xb0] sm:$0xff]
    %v721 = vld [vmem:[%s697 + $0xb8] sm:$0xff]
    %v722 = vld [vmem:[%s697 + $0xc0] sm:$0xff]
    %v723 = vld [vmem:[%s697 + $0xc8] sm:$0xff]
    %v724 = vld [vmem:[%s697 + $0xd0] sm:$0xff]
    %v725 = vld [vmem:[%s697 + $0xd8] sm:$0xff]
    %v726 = vld [vmem:[%s697 + $0xe0] sm:$0xff]
    %v727 = vld [vmem:[%s697 + $0xe8] sm:$0xff]
    %v728 = vld [vmem:[%s697 + $0xf0] sm:$0xff]
    %v729 = vld [vmem:[%s697 + $0xf8] sm:$0xff]
    %v762 = vunpack.c.l.b16 %v698
    %v763 = vunpack.c.h.b16 %v698
    %v764 = vunpack.c.l.b16 %v699
    %v765 = vunpack.c.h.b16 %v699
    %v766 = vunpack.c.l.b16 %v700
    %v767 = vunpack.c.h.b16 %v700
    %v768 = vunpack.c.l.b16 %v701
    %v769 = vunpack.c.h.b16 %v701
    %v770 = vunpack.c.l.b16 %v702
    %v771 = vunpack.c.h.b16 %v702
    %v772 = vunpack.c.l.b16 %v703
    %v773 = vunpack.c.h.b16 %v703
    %v774 = vunpack.c.l.b16 %v704
    %v775 = vunpack.c.h.b16 %v704
    %v776 = vunpack.c.l.b16 %v705
    %v777 = vunpack.c.h.b16 %v705
    %v778 = vunpack.c.l.b16 %v706
    %v779 = vunpack.c.h.b16 %v706
    %v780 = vunpack.c.l.b16 %v707
    %v781 = vunpack.c.h.b16 %v707
    %v782 = vunpack.c.l.b16 %v708
    %v783 = vunpack.c.h.b16 %v708
    %v784 = vunpack.c.l.b16 %v709
    %v785 = vunpack.c.h.b16 %v709
    %v786 = vunpack.c.l.b16 %v710
    %v787 = vunpack.c.h.b16 %v710
    %v788 = vunpack.c.l.b16 %v711
    %v789 = vunpack.c.h.b16 %v711
    %v790 = vunpack.c.l.b16 %v712
    %v791 = vunpack.c.h.b16 %v712
    %v792 = vunpack.c.l.b16 %v713
    %v793 = vunpack.c.h.b16 %v713
    %v794 = vunpack.c.l.b16 %v714
    %v795 = vunpack.c.h.b16 %v714
    %v796 = vunpack.c.l.b16 %v715
    %v797 = vunpack.c.h.b16 %v715
    %v798 = vunpack.c.l.b16 %v716
    %v799 = vunpack.c.h.b16 %v716
    %v800 = vunpack.c.l.b16 %v717
    %v801 = vunpack.c.h.b16 %v717
    %v802 = vunpack.c.l.b16 %v718
    %v803 = vunpack.c.h.b16 %v718
    %v804 = vunpack.c.l.b16 %v719
    %v805 = vunpack.c.h.b16 %v719
    %v806 = vunpack.c.l.b16 %v720
    %v807 = vunpack.c.h.b16 %v720
    %v808 = vunpack.c.l.b16 %v721
    %v809 = vunpack.c.h.b16 %v721
    %v810 = vunpack.c.l.b16 %v722
    %v811 = vunpack.c.h.b16 %v722
    %v812 = vunpack.c.l.b16 %v723
    %v813 = vunpack.c.h.b16 %v723
    %v814 = vunpack.c.l.b16 %v724
    %v815 = vunpack.c.h.b16 %v724
    %v816 = vunpack.c.l.b16 %v725
    %v817 = vunpack.c.h.b16 %v725
    %v818 = vunpack.c.l.b16 %v726
    %v819 = vunpack.c.h.b16 %v726
    %v820 = vunpack.c.l.b16 %v727
    %v821 = vunpack.c.h.b16 %v727
    %v822 = vunpack.c.l.b16 %v728
    %v823 = vunpack.c.h.b16 %v728
    %v824 = vunpack.c.l.b16 %v729
    %v825 = vunpack.c.h.b16 %v729
    %v826 = vpack.c.b16 %v766, %v762
    %v827 = vpack.c.b16 %v767, %v763
    %v828 = vpack.c.b16 %v768, %v764
    %v829 = vpack.c.b16 %v769, %v765
    %v830 = vpack.c.b16 %v774, %v770
    %v831 = vpack.c.b16 %v775, %v771
    %v832 = vpack.c.b16 %v776, %v772
    %v833 = vpack.c.b16 %v777, %v773
    %v834 = vpack.c.b16 %v782, %v778
    %v835 = vpack.c.b16 %v783, %v779
    %v836 = vpack.c.b16 %v784, %v780
    %v837 = vpack.c.b16 %v785, %v781
    %v838 = vpack.c.b16 %v790, %v786
    %v839 = vpack.c.b16 %v791, %v787
    %v840 = vpack.c.b16 %v792, %v788
    %v841 = vpack.c.b16 %v793, %v789
    %v842 = vpack.c.b16 %v798, %v794
    %v843 = vpack.c.b16 %v799, %v795
    %v844 = vpack.c.b16 %v800, %v796
    %v845 = vpack.c.b16 %v801, %v797
    %v846 = vpack.c.b16 %v806, %v802
    %v847 = vpack.c.b16 %v807, %v803
    %v848 = vpack.c.b16 %v808, %v804
    %v849 = vpack.c.b16 %v809, %v805
    %v850 = vpack.c.b16 %v814, %v810
    %v851 = vpack.c.b16 %v815, %v811
    %v852 = vpack.c.b16 %v816, %v812
    %v853 = vpack.c.b16 %v817, %v813
    %v854 = vpack.c.b16 %v822, %v818
    %v855 = vpack.c.b16 %v823, %v819
    %v856 = vpack.c.b16 %v824, %v820
    %v857 = vpack.c.b16 %v825, %v821
    %890 = vmatpush.bf16.msra.mxu0 %v854
    %891 = vmatpush.bf16.msra.mxu0 %v850
    %892 = vmatpush.bf16.msra.mxu0 %v846
    %893 = vmatpush.bf16.msra.mxu0 %v842
    %894 = vmatpush.bf16.msra.mxu0 %v838
    %895 = vmatpush.bf16.msra.mxu0 %v834
    %896 = vmatpush.bf16.msra.mxu0 %v830
    %897 = vmatpush.bf16.msra.mxu0 %v826
    %898 = vmatmul.bf16.gmra.mxu0 %v696
    %v899 = vpop.f32.mrf.mxu0
    %v900 = vadd.f32 0.0, %v899
    %v901 = vpop.f32.mrf.mxu0
    %902 = vdwg.mxu0
    %903 = vmatpush.bf16.msra.mxu0 %v855
    %904 = vmatpush.bf16.msra.mxu0 %v851
    %905 = vmatpush.bf16.msra.mxu0 %v847
    %906 = vmatpush.bf16.msra.mxu0 %v843
    %907 = vmatpush.bf16.msra.mxu0 %v839
    %908 = vmatpush.bf16.msra.mxu0 %v835
    %909 = vmatpush.bf16.msra.mxu0 %v831
    %910 = vmatpush.bf16.msra.mxu0 %v827
    %911 = vmatmul.bf16.gmra.mxu0 %v696
    %v912 = vpop.f32.mrf.mxu0
    %v913 = vadd.f32 0.0, %v912
    %v914 = vpop.f32.mrf.mxu0
    %915 = vdwg.mxu0
    %916 = vmatpush.bf16.msra.mxu0 %v856
    %917 = vmatpush.bf16.msra.mxu0 %v852
    %918 = vmatpush.bf16.msra.mxu0 %v848
    %919 = vmatpush.bf16.msra.mxu0 %v844
    %920 = vmatpush.bf16.msra.mxu0 %v840
    %921 = vmatpush.bf16.msra.mxu0 %v836
    %922 = vmatpush.bf16.msra.mxu0 %v832
    %923 = vmatpush.bf16.msra.mxu0 %v828
    %924 = vmatmul.bf16.gmra.mxu0 %v696
    %v925 = vpop.f32.mrf.mxu0
    %v926 = vadd.f32 0.0, %v925
    %v927 = vpop.f32.mrf.mxu0
    %928 = vdwg.mxu0
    %929 = vmatpush.bf16.msra.mxu0 %v857
    %930 = vmatpush.bf16.msra.mxu0 %v853
    %931 = vmatpush.bf16.msra.mxu0 %v849
    %932 = vmatpush.bf16.msra.mxu0 %v845
    %933 = vmatpush.bf16.msra.mxu0 %v841
    %934 = vmatpush.bf16.msra.mxu0 %v837
    %935 = vmatpush.bf16.msra.mxu0 %v833
    %936 = vmatpush.bf16.msra.mxu0 %v829
    %937 = vmatmul.bf16.gmra.mxu0 %v696
    %v938 = vpop.f32.mrf.mxu0
    %v939 = vadd.f32 0.0, %v938
    %v940 = vpop.f32.mrf.mxu0
    %941 = vdwg.mxu0
    %v974 = vunpack.c.l.b16 %v664
    %v975 = vunpack.c.h.b16 %v664
    %v976 = vunpack.c.l.b16 %v665
    %v977 = vunpack.c.h.b16 %v665
    %v978 = vunpack.c.l.b16 %v666
    %v979 = vunpack.c.h.b16 %v666
    %v980 = vunpack.c.l.b16 %v667
    %v981 = vunpack.c.h.b16 %v667
    %v982 = vunpack.c.l.b16 %v668
    %v983 = vunpack.c.h.b16 %v668
    %v984 = vunpack.c.l.b16 %v669
    %v985 = vunpack.c.h.b16 %v669
    %v986 = vunpack.c.l.b16 %v670
    %v987 = vunpack.c.h.b16 %v670
    %v988 = vunpack.c.l.b16 %v671
    %v989 = vunpack.c.h.b16 %v671
    %v990 = vunpack.c.l.b16 %v672
    %v991 = vunpack.c.h.b16 %v672
    %v992 = vunpack.c.l.b16 %v673
    %v993 = vunpack.c.h.b16 %v673
    %v994 = vunpack.c.l.b16 %v674
    %v995 = vunpack.c.h.b16 %v674
    %v996 = vunpack.c.l.b16 %v675
    %v997 = vunpack.c.h.b16 %v675
    %v998 = vunpack.c.l.b16 %v676
    %v999 = vunpack.c.h.b16 %v676
    %v1000 = vunpack.c.l.b16 %v677
    %v1001 = vunpack.c.h.b16 %v677
    %v1002 = vunpack.c.l.b16 %v678
    %v1003 = vunpack.c.h.b16 %v678
    %v1004 = vunpack.c.l.b16 %v679
    %v1005 = vunpack.c.h.b16 %v679
    %v1006 = vunpack.c.l.b16 %v680
    %v1007 = vunpack.c.h.b16 %v680
    %v1008 = vunpack.c.l.b16 %v681
    %v1009 = vunpack.c.h.b16 %v681
    %v1010 = vunpack.c.l.b16 %v682
    %v1011 = vunpack.c.h.b16 %v682
    %v1012 = vunpack.c.l.b16 %v683
    %v1013 = vunpack.c.h.b16 %v683
    %v1014 = vunpack.c.l.b16 %v684
    %v1015 = vunpack.c.h.b16 %v684
    %v1016 = vunpack.c.l.b16 %v685
    %v1017 = vunpack.c.h.b16 %v685
    %v1018 = vunpack.c.l.b16 %v686
    %v1019 = vunpack.c.h.b16 %v686
    %v1020 = vunpack.c.l.b16 %v687
    %v1021 = vunpack.c.h.b16 %v687
    %v1022 = vunpack.c.l.b16 %v688
    %v1023 = vunpack.c.h.b16 %v688
    %v1024 = vunpack.c.l.b16 %v689
    %v1025 = vunpack.c.h.b16 %v689
    %v1026 = vunpack.c.l.b16 %v690
    %v1027 = vunpack.c.h.b16 %v690
    %v1028 = vunpack.c.l.b16 %v691
    %v1029 = vunpack.c.h.b16 %v691
    %v1030 = vunpack.c.l.b16 %v692
    %v1031 = vunpack.c.h.b16 %v692
    %v1032 = vunpack.c.l.b16 %v693
    %v1033 = vunpack.c.h.b16 %v693
    %v1034 = vunpack.c.l.b16 %v694
    %v1035 = vunpack.c.h.b16 %v694
    %v1036 = vunpack.c.l.b16 %v695
    %v1037 = vunpack.c.h.b16 %v695
    %v1038 = vpack.c.b16 %v978, %v974
    %v1039 = vpack.c.b16 %v979, %v975
    %v1040 = vpack.c.b16 %v980, %v976
    %v1041 = vpack.c.b16 %v981, %v977
    %v1042 = vpack.c.b16 %v986, %v982
    %v1043 = vpack.c.b16 %v987, %v983
    %v1044 = vpack.c.b16 %v988, %v984
    %v1045 = vpack.c.b16 %v989, %v985
    %v1046 = vpack.c.b16 %v994, %v990
    %v1047 = vpack.c.b16 %v995, %v991
    %v1048 = vpack.c.b16 %v996, %v992
    %v1049 = vpack.c.b16 %v997, %v993
    %v1050 = vpack.c.b16 %v1002, %v998
    %v1051 = vpack.c.b16 %v1003, %v999
    %v1052 = vpack.c.b16 %v1004, %v1000
    %v1053 = vpack.c.b16 %v1005, %v1001
    %v1054 = vpack.c.b16 %v1010, %v1006
    %v1055 = vpack.c.b16 %v1011, %v1007
    %v1056 = vpack.c.b16 %v1012, %v1008
    %v1057 = vpack.c.b16 %v1013, %v1009
    %v1058 = vpack.c.b16 %v1018, %v1014
    %v1059 = vpack.c.b16 %v1019, %v1015
    %v1060 = vpack.c.b16 %v1020, %v1016
    %v1061 = vpack.c.b16 %v1021, %v1017
    %v1062 = vpack.c.b16 %v1026, %v1022
    %v1063 = vpack.c.b16 %v1027, %v1023
    %v1064 = vpack.c.b16 %v1028, %v1024
    %v1065 = vpack.c.b16 %v1029, %v1025
    %v1066 = vpack.c.b16 %v1034, %v1030
    %v1067 = vpack.c.b16 %v1035, %v1031
    %v1068 = vpack.c.b16 %v1036, %v1032
    %v1069 = vpack.c.b16 %v1037, %v1033
    %1102 = vmatpush.bf16.msra.mxu0 %v1066
    %1103 = vmatpush.bf16.msra.mxu0 %v1062
    %1104 = vmatpush.bf16.msra.mxu0 %v1058
    %1105 = vmatpush.bf16.msra.mxu0 %v1054
    %1106 = vmatpush.bf16.msra.mxu0 %v1050
    %1107 = vmatpush.bf16.msra.mxu0 %v1046
    %1108 = vmatpush.bf16.msra.mxu0 %v1042
    %1109 = vmatpush.bf16.msra.mxu0 %v1038
    %1110 = vmatmul.bf16.gmra.mxu0 %v663
    %v1111 = vpop.f32.mrf.mxu0
    %v1112 = vadd.f32 %v900, %v1111
    %v1113 = vpop.f32.mrf.mxu0
    %1114 = vdwg.mxu0
    %1115 = vmatpush.bf16.msra.mxu0 %v1067
    %1116 = vmatpush.bf16.msra.mxu0 %v1063
    %1117 = vmatpush.bf16.msra.mxu0 %v1059
    %1118 = vmatpush.bf16.msra.mxu0 %v1055
    %1119 = vmatpush.bf16.msra.mxu0 %v1051
    %1120 = vmatpush.bf16.msra.mxu0 %v1047
    %1121 = vmatpush.bf16.msra.mxu0 %v1043
    %1122 = vmatpush.bf16.msra.mxu0 %v1039
    %1123 = vmatmul.bf16.gmra.mxu0 %v663
    %v1124 = vpop.f32.mrf.mxu0
    %v1125 = vadd.f32 %v913, %v1124
    %v1126 = vpop.f32.mrf.mxu0
    %1127 = vdwg.mxu0
    %1128 = vmatpush.bf16.msra.mxu0 %v1068
    %1129 = vmatpush.bf16.msra.mxu0 %v1064
    %1130 = vmatpush.bf16.msra.mxu0 %v1060
    %1131 = vmatpush.bf16.msra.mxu0 %v1056
    %1132 = vmatpush.bf16.msra.mxu0 %v1052
    %1133 = vmatpush.bf16.msra.mxu0 %v1048
    %1134 = vmatpush.bf16.msra.mxu0 %v1044
    %1135 = vmatpush.bf16.msra.mxu0 %v1040
    %1136 = vmatmul.bf16.gmra.mxu0 %v663
    %v1137 = vpop.f32.mrf.mxu0
    %v1138 = vadd.f32 %v926, %v1137
    %v1139 = vpop.f32.mrf.mxu0
    %1140 = vdwg.mxu0
    %1141 = vmatpush.bf16.msra.mxu0 %v1069
    %1142 = vmatpush.bf16.msra.mxu0 %v1065
    %1143 = vmatpush.bf16.msra.mxu0 %v1061
    %1144 = vmatpush.bf16.msra.mxu0 %v1057
    %1145 = vmatpush.bf16.msra.mxu0 %v1053
    %1146 = vmatpush.bf16.msra.mxu0 %v1049
    %1147 = vmatpush.bf16.msra.mxu0 %v1045
    %1148 = vmatpush.bf16.msra.mxu0 %v1041
    %1149 = vmatmul.bf16.gmra.mxu0 %v663
    %v1150 = vpop.f32.mrf.mxu0
    %v1151 = vadd.f32 %v939, %v1150
    %v1152 = vpop.f32.mrf.mxu0
    %1153 = vdwg.mxu0
    %s1154 = scalar_lea.vmem %s5, 4
    %v1155 = vld [vmem:[%s1154] sm:$0xf]
    %v1157 = vperm.slane %v1155, 0
    %v1158 = vperm.slane %v1155, 1
    %v1159 = vperm.slane %v1155, 2
    %v1160 = vperm.slane %v1155, 3
    %v1165 = vadd.f32 %v1112, %v1157
    %v1166 = vadd.f32 %v1125, %v1158
    %v1167 = vadd.f32 %v1138, %v1159
    %v1168 = vadd.f32 %v1151, %v1160
    %v1169 = vxor.u32 %v1165, 2147483648
    %v1170 = vmul.f32 %v1169, 1.442695
    %v1171 = vpow.pop %v1170
    %v1172 = vadd.f32 %v1171, 1.0
    %v1173 = vrcp.pop %v1172
    %v1174 = vmul.f32 %v1172, %v1173
    %v1175 = vsub.f32 1.0, %v1174
    %v1176 = vmul.f32 %v1173, %v1175
    %v1177 = vadd.f32 %v1173, %v1176
    %vm1178 = vweird.f32 %v1172
    %vm1179 = vweird.f32 %v1173
    %vm1180 = vmor %vm1178, %vm1179
    %v1181 = vsel %vm1180, %v1173, %v1177
    %v1182 = vand.u32 2147483647, %v1172
    %vm1183 = vcmp.eq.f32.partialorder %v1182, 8.507059e+37
    %v1184 = vand.u32 %v1172, 2147483648
    %v1185 = vor.u32 1.1754944e-38, %v1184
    %v1186 = vsel %vm1183, %v1185, %v1181
    %v1187 = vmul.f32 1.0, %v1186
    %v1188 = vxor.u32 %v1166, 2147483648
    %v1189 = vmul.f32 %v1188, 1.442695
    %v1190 = vpow.pop %v1189
    %v1191 = vadd.f32 %v1190, 1.0
    %v1192 = vrcp.pop %v1191
    %v1193 = vmul.f32 %v1191, %v1192
    %v1194 = vsub.f32 1.0, %v1193
    %v1195 = vmul.f32 %v1192, %v1194
    %v1196 = vadd.f32 %v1192, %v1195
    %vm1197 = vweird.f32 %v1191
    %vm1198 = vweird.f32 %v1192
    %vm1199 = vmor %vm1197, %vm1198
    %v1200 = vsel %vm1199, %v1192, %v1196
    %v1201 = vand.u32 2147483647, %v1191
    %vm1202 = vcmp.eq.f32.partialorder %v1201, 8.507059e+37
    %v1203 = vand.u32 %v1191, 2147483648
    %v1204 = vor.u32 1.1754944e-38, %v1203
    %v1205 = vsel %vm1202, %v1204, %v1200
    %v1206 = vmul.f32 1.0, %v1205
    %v1207 = vmul.f32 %v1187, %v1168
    %v1208 = vadd.f32 %v1167, %v1207
    %v1209 = vtanh.pop %v1208
    %v1210 = vsub.f32 1.0, %v1206
    %v1211 = vmul.f32 %v1210, %v1209
    %v1212 = vmul.f32 %v1206, %v662
    %v1213 = vadd.f32 %v1211, %v1212
    %1214 = vst [vmem:[%s661] sm:$0xff] %v1213
    %v1215 = vpack.c.bf16 %v1213, %v1213
    %v1216 = vld [vmem:[#allocation7] sm:$0xf]
    %v1217 = vld [vmem:[#allocation7 + $0x4] sm:$0xf]
    %v1218 = vld [vmem:[#allocation7 + $0x8] sm:$0xf]
    %v1219 = vld [vmem:[#allocation7 + $0xc] sm:$0xf]
    %v1220 = vld [vmem:[#allocation7 + $0x10] sm:$0xf]
    %v1221 = vld [vmem:[#allocation7 + $0x14] sm:$0xf]
    %v1222 = vld [vmem:[#allocation7 + $0x18] sm:$0xf]
    %v1223 = vld [vmem:[#allocation7 + $0x1c] sm:$0xf]
    %v1224 = vld [vmem:[#allocation7 + $0x20] sm:$0xf]
    %v1225 = vld [vmem:[#allocation7 + $0x24] sm:$0xf]
    %v1226 = vld [vmem:[#allocation7 + $0x28] sm:$0xf]
    %v1227 = vld [vmem:[#allocation7 + $0x2c] sm:$0xf]
    %v1228 = vld [vmem:[#allocation7 + $0x30] sm:$0xf]
    %v1229 = vld [vmem:[#allocation7 + $0x34] sm:$0xf]
    %v1230 = vld [vmem:[#allocation7 + $0x38] sm:$0xf]
    %v1231 = vld [vmem:[#allocation7 + $0x3c] sm:$0xf]
    %v1232 = vld [vmem:[%s7] sm:$0x1]
    %v1234 = vperm.slane %v1232, 0
    %v1252 = vunpack.c.l.b16 %v1216
    %v1253 = vunpack.c.l.b16 %v1217
    %v1254 = vunpack.c.l.b16 %v1218
    %v1255 = vunpack.c.l.b16 %v1219
    %v1256 = vunpack.c.l.b16 %v1220
    %v1257 = vunpack.c.l.b16 %v1221
    %v1258 = vunpack.c.l.b16 %v1222
    %v1259 = vunpack.c.l.b16 %v1223
    %v1260 = vunpack.c.l.b16 %v1224
    %v1261 = vunpack.c.l.b16 %v1225
    %v1262 = vunpack.c.l.b16 %v1226
    %v1263 = vunpack.c.l.b16 %v1227
    %v1264 = vunpack.c.l.b16 %v1228
    %v1265 = vunpack.c.l.b16 %v1229
    %v1266 = vunpack.c.l.b16 %v1230
    %v1267 = vunpack.c.l.b16 %v1231
    %v1268 = vpack.c.b16 %v1253, %v1252
    %v1269 = vpack.c.b16 %v1255, %v1254
    %v1270 = vpack.c.b16 %v1257, %v1256
    %v1271 = vpack.c.b16 %v1259, %v1258
    %v1272 = vpack.c.b16 %v1261, %v1260
    %v1273 = vpack.c.b16 %v1263, %v1262
    %v1274 = vpack.c.b16 %v1265, %v1264
    %v1275 = vpack.c.b16 %v1267, %v1266
    %1284 = vmatpush.bf16.msra.mxu0 %v1275
    %1285 = vmatpush.bf16.msra.mxu0 %v1274
    %1286 = vmatpush.bf16.msra.mxu0 %v1273
    %1287 = vmatpush.bf16.msra.mxu0 %v1272
    %1288 = vmatpush.bf16.msra.mxu0 %v1271
    %1289 = vmatpush.bf16.msra.mxu0 %v1270
    %1290 = vmatpush.bf16.msra.mxu0 %v1269
    %1291 = vmatpush.bf16.msra.mxu0 %v1268
    %1292 = vmatmul.bf16.gmra.mxu0 %v1215
    %v1293 = vpop.f32.mrf.mxu0
    %v1294 = vadd.f32 %v1234, %v1293
    %v1295 = vpop.f32.mrf.mxu0
    %1296 = vdwg.mxu0
    %v1297 = vmax.f32 %v1294, 0.0
    %1298 = vst [vmem:[%s8] sm:$0xff] %v1297
    // Predicated region
    $region54: #{_fwd.1} parent=1 // pred_check
      _
    $region55: #{_fwd.1} parent=1 // pred_check_branch
      %1300 = sbr.rel (0) target = $region57
    $region56: #{_fwd.1} parent=1 // pred_region
      _
    $region57: #{_fwd.1} parent=1 // pred_fallthru
      _
    // Predicated region
    $region58: #{_fwd.1} parent=1 // pred_check
      _
    $region59: #{_fwd.1} parent=1 // pred_check_branch
      %1302 = sbr.rel (0) target = $region61
    $region60: #{_fwd.1} parent=1 // pred_region
      _
    $region61: #{_fwd.1} parent=1 // pred_fallthru
      _
    // Predicated region
    $region62: #{_fwd.1} parent=1 // pred_check
      _
    $region63: #{_fwd.1} parent=1 // pred_check_branch
      %1304 = sbr.rel (0) target = $region65
    $region64: #{_fwd.1} parent=1 // pred_region
      _
    $region65: #{_fwd.1} parent=1 // pred_fallthru
      _
    // Predicated region
    $region66: #{_fwd.1} parent=1 // pred_check
      _
    $region67: #{_fwd.1} parent=1 // pred_check_branch
      %1306 = sbr.rel (0) target = $region69
    $region68: #{_fwd.1} parent=1 // pred_region
      _
    $region69: #{_fwd.1} parent=1 // pred_fallthru
      _
    %1307 = vsyncpa [#allocation3], 1
    %1308 = vsyncpa [#allocation5], 1
    %1309 = vsyncpa [#allocation8], 1

</llo_original>
